<compile_context>
chip_gen: v5e
topology: v5e:2x2
jax: 0.10.0
libtpu: 0.0.40
codegen_flags: <defaults>
</compile_context>

<pallas_src>
import functools

import jax
import jax.numpy as jnp
from jax.experimental import pallas as pl
from jax.experimental.pallas import tpu as pltpu

LN_EPS = 1e-5  # nn.LayerNorm default eps


def _round_up(n, m):
    return ((n + m - 1) // m) * m


def _gated_ffn_kernel(n_hidden, hidden_sizes, x_ref, *refs):
    """refs = ([W_i(bf16), slab_i(f32 [3,H]=b/gamma/beta)] * n_hidden, W_out(bf16), b_out(f32), out)."""
    out_ref = refs[-1]
    params = refs[:-1]

    x = x_ref[...]  # f32 activations for this batch tile
    idx = 0
    for li in range(n_hidden):
        w = params[idx][...]        # bf16 [in_pad, h_pad]
        vec = params[idx + 1][...]  # f32  [3, h_pad]  (bias, gamma, beta)
        idx += 2
        b = vec[0:1, :]
        gamma = vec[1:2, :]
        beta = vec[2:3, :]

        # Linear (bf16 MXU, f32 accumulate)
        h = jnp.dot(x.astype(jnp.bfloat16), w, preferred_element_type=jnp.float32) + b
        # Activation: Swish / SiLU
        a = h * jax.nn.sigmoid(h)
        # Gate applied right after activation in forward(): x = x * sigmoid(x)
        g = a * jax.nn.sigmoid(a)

        # LayerNorm over the TRUE feature count (padded columns of g are exactly 0,
        # so the sums are exact); fused one-pass statistics.
        inv_n = 1.0 / float(hidden_sizes[li])
        s1 = jnp.sum(g, axis=-1, keepdims=True)
        s2 = jnp.sum(g * g, axis=-1, keepdims=True)
        mean = s1 * inv_n
        var = s2 * inv_n - mean * mean
        x = (g - mean) * jax.lax.rsqrt(var + LN_EPS) * gamma + beta
        # TODO(synk): nn.Dropout is identity at inference; training-mode random masking not implemented.

    w_out = params[idx][...]     # bf16 [h_pad, out_pad]
    b_out = params[idx + 1][...]  # f32  [1, out_pad]
    out_ref[...] = (
        jnp.dot(x.astype(jnp.bfloat16), w_out, preferred_element_type=jnp.float32) + b_out
    ).astype(out_ref.dtype)


def gated_ffn_forward(x, flat_params, hidden_layers, output_size, *, tb=128):
    """x: [batch, input_size] f32. flat_params: logical (unpadded) f32 params
    [W_i(in,out), b_i(1,h), gamma_i(1,h), beta_i(1,h)]*n_hidden + [W_out, b_out]."""
    batch, input_size = x.shape
    n_hidden = len(hidden_layers)

    in_pad = _round_up(input_size, 128)
    hid_pad = [_round_up(h, 128) for h in hidden_layers]
    out_pad = _round_up(output_size, 128)

    # Batch tiling: TB-row tiles (sublane-aligned); small batches collapse to one tile.
    bp = _round_up(batch, 8)
    if bp > tb:
        bp = _round_up(batch, tb)
    else:
        tb = bp
    grid = (bp // tb,)

    # Pad input with zeros (extra rows sliced off at the end; extra cols hit zero W rows).
    x_p = jnp.zeros((bp, in_pad), jnp.float32).at[:batch, :input_size].set(x)

    args = [x_p]
    in_specs = [pl.BlockSpec((tb, in_pad), lambda i: (i, 0))]

    prev_pad = in_pad
    idx = 0
    for li, h in enumerate(hidden_layers):
        w, b, gamma, beta = flat_params[idx:idx + 4]
        idx += 4
        hp = hid_pad[li]
        # bf16 weights, zero-padded; pad gamma/beta with zeros so padded columns stay 0.
        w_p = jnp.zeros((prev_pad, hp), jnp.bfloat16).at[:w.shape[0], :h].set(w.astype(jnp.bfloat16))
        slab = jnp.zeros((3, hp), jnp.float32)
        slab = slab.at[0, :h].set(b.reshape(-1))
        slab = slab.at[1, :h].set(gamma.reshape(-1))
        slab = slab.at[2, :h].set(beta.reshape(-1))
        args += [w_p, slab]
        # Constant block index -> weights/slabs stay VMEM-resident across batch steps.
        in_specs += [
            pl.BlockSpec((prev_pad, hp), lambda i: (0, 0)),
            pl.BlockSpec((3, hp), lambda i: (0, 0)),
        ]
        prev_pad = hp

    w_out, b_out = flat_params[idx], flat_params[idx + 1]
    w_out_p = (
        jnp.zeros((prev_pad, out_pad), jnp.bfloat16)
        .at[:w_out.shape[0], :output_size]
        .set(w_out.astype(jnp.bfloat16))
    )
    b_out_p = jnp.zeros((1, out_pad), jnp.float32).at[0, :output_size].set(b_out.reshape(-1))
    args += [w_out_p, b_out_p]
    in_specs += [
        pl.BlockSpec((prev_pad, out_pad), lambda i: (0, 0)),
        pl.BlockSpec((1, out_pad), lambda i: (0, 0)),
    ]

    kernel = functools.partial(_gated_ffn_kernel, n_hidden, tuple(int(h) for h in hidden_layers))
    out = pl.pallas_call(
        kernel,
        out_shape=jax.ShapeDtypeStruct((bp, out_pad), jnp.float32),
        grid=grid,
        in_specs=in_specs,
        out_specs=pl.BlockSpec((tb, out_pad), lambda i: (i, 0)),
        compiler_params=pltpu.CompilerParams(
            dimension_semantics=("parallel",),
            vmem_limit_bytes=32 * 1024 * 1024,
        ),
    )(*args)
    # TODO(synk): for very large hidden dims (>~2048) add a K-grid axis + f32 accumulator
    # instead of keeping whole weight matrices VMEM-resident (matters most on v7x's 64 MiB VMEM).
    return out[:batch, :output_size]


def init_params(key, input_size, hidden_layers, output_size):
    """Deterministic He ('kaiming_normal', mode=fan_out, relu) init; biases/LN-beta zero, LN-gamma one.
    Weights stored [in, out] (transposed vs. PyTorch) so the kernel computes x @ W + b."""
    params = []
    prev = input_size
    for h in hidden_layers:
        key, wk = jax.random.split(key)
        std = (2.0 / h) ** 0.5  # fan_out = out_features for nn.Linear weight
        w = std * jax.random.normal(wk, (prev, h), dtype=jnp.float32)
        b = jnp.zeros((1, h), dtype=jnp.float32)
        gamma = jnp.ones((1, h), dtype=jnp.float32)
        beta = jnp.zeros((1, h), dtype=jnp.float32)
        params += [w, b, gamma, beta]
        prev = h
    key, wk = jax.random.split(key)
    std = (2.0 / output_size) ** 0.5
    w_out = std * jax.random.normal(wk, (prev, output_size), dtype=jnp.float32)
    b_out = jnp.zeros((1, output_size), dtype=jnp.float32)
    params += [w_out, b_out]
    return tuple(params)


def reference_forward(x, flat_params, n_hidden):
    """Pure-JAX reference matching the PyTorch forward (eval mode), with the same
    bf16-matmul / f32-accumulate numerics as the kernel."""
    idx = 0
    for _ in range(n_hidden):
        w, b, gamma, beta = flat_params[idx:idx + 4]
        idx += 4
        h = jnp.dot(x.astype(jnp.bfloat16), w.astype(jnp.bfloat16),
                    preferred_element_type=jnp.float32) + b
        a = h * jax.nn.sigmoid(h)
        g = a * jax.nn.sigmoid(a)
        mean = jnp.mean(g, axis=-1, keepdims=True)
        var = jnp.mean((g - mean) ** 2, axis=-1, keepdims=True)
        x = (g - mean) / jnp.sqrt(var + LN_EPS) * gamma + beta
    w_out, b_out = flat_params[idx], flat_params[idx + 1]
    return jnp.dot(x.astype(jnp.bfloat16), w_out.astype(jnp.bfloat16),
                   preferred_element_type=jnp.float32) + b_out


if __name__ == "__main__":
    batch = 200                 # pads to 256 -> 2 batch tiles of 128
    input_size = 32
    hidden_layers = [64, 32]
    output_size = 16

    key = jax.random.PRNGKey(0)
    key, xk = jax.random.split(key)
    x = jax.random.normal(xk, (batch, input_size), dtype=jnp.float32)
    params = init_params(key, input_size, hidden_layers, output_size)

    out = gated_ffn_forward(x, params, hidden_layers, output_size)
    out = jax.block_until_ready(out)

    ref = reference_forward(x, params, len(hidden_layers))
    assert out.shape == (batch, output_size)
    assert jnp.allclose(out, ref, atol=2e-2, rtol=2e-2), "mismatch vs pure-JAX reference"

    print("KERNEL_OK")
</pallas_src>

<mosaic_0001>
module attributes {stable_mosaic.version = 11 : i64} {
  func.func @_gated_ffn_kernel(%arg0: i32, %arg1: memref<128x128xf32, #tpu.memory_space<vmem>>, %arg2: memref<128x128xbf16, #tpu.memory_space<vmem>>, %arg3: memref<3x128xf32, #tpu.memory_space<vmem>>, %arg4: memref<128x128xbf16, #tpu.memory_space<vmem>>, %arg5: memref<3x128xf32, #tpu.memory_space<vmem>>, %arg6: memref<128x128xbf16, #tpu.memory_space<vmem>>, %arg7: memref<1x128xf32, #tpu.memory_space<vmem>>, %arg8: memref<128x128xf32, #tpu.memory_space<vmem>>) attributes {dimension_semantics = [#tpu.dimension_semantics<parallel>], iteration_bounds = array<i64: 2>, scalar_prefetch = 0 : i64, scratch_operands = 0 : i64, tpu.core_type = #tpu.core_type<tc>, window_params = [{transform_indices = @transform_0, window_bounds = array<i64: 128, 128>}, {pipeline_mode = #tpu.pipeline_mode<synchronous>, transform_indices = @transform_1, window_bounds = array<i64: 128, 128>}, {pipeline_mode = #tpu.pipeline_mode<synchronous>, transform_indices = @transform_2, window_bounds = array<i64: 3, 128>}, {pipeline_mode = #tpu.pipeline_mode<synchronous>, transform_indices = @transform_3, window_bounds = array<i64: 128, 128>}, {pipeline_mode = #tpu.pipeline_mode<synchronous>, transform_indices = @transform_4, window_bounds = array<i64: 3, 128>}, {pipeline_mode = #tpu.pipeline_mode<synchronous>, transform_indices = @transform_5, window_bounds = array<i64: 128, 128>}, {pipeline_mode = #tpu.pipeline_mode<synchronous>, transform_indices = @transform_6, window_bounds = array<i64: 1, 128>}, {transform_indices = @transform_7, window_bounds = array<i64: 128, 128>}]} {
    %c0 = arith.constant 0 : index
    %c0_0 = arith.constant 0 : index
    %0 = vector.load %arg1[%c0, %c0_0] : memref<128x128xf32, #tpu.memory_space<vmem>>, vector<128x128xf32>
    %c0_1 = arith.constant 0 : index
    %c0_2 = arith.constant 0 : index
    %1 = vector.load %arg2[%c0_1, %c0_2] : memref<128x128xbf16, #tpu.memory_space<vmem>>, vector<128x128xbf16>
    %c0_3 = arith.constant 0 : index
    %c0_4 = arith.constant 0 : index
    %2 = vector.load %arg3[%c0_3, %c0_4] : memref<3x128xf32, #tpu.memory_space<vmem>>, vector<3x128xf32>
    %3 = vector.extract_strided_slice %2 {offsets = [0, 0], sizes = [1, 128], strides = [1, 1]} : vector<3x128xf32> to vector<1x128xf32>
    %4 = vector.extract_strided_slice %2 {offsets = [1, 0], sizes = [1, 128], strides = [1, 1]} : vector<3x128xf32> to vector<1x128xf32>
    %5 = vector.extract_strided_slice %2 {offsets = [2, 0], sizes = [1, 128], strides = [1, 1]} : vector<3x128xf32> to vector<1x128xf32>
    %6 = arith.truncf %0 : vector<128x128xf32> to vector<128x128xbf16>
    %cst = arith.constant dense<0.000000e+00> : vector<128x128xf32>
    %7 = tpu.matmul %6, %1, %cst {dimension_numbers = #tpu.dot_dimension_numbers<[1], [0], [0], [1], [0, 0, 1, 1], [], []>} : vector<128x128xbf16>, vector<128x128xbf16>, vector<128x128xf32> -> vector<128x128xf32>
    %8 = vector.broadcast %3 : vector<1x128xf32> to vector<128x128xf32>
    %9 = arith.addf %7, %8 : vector<128x128xf32>
    %10 = arith.negf %9 : vector<128x128xf32>
    %11 = math.exp %10 : vector<128x128xf32>
    %cst_5 = arith.constant 1.000000e+00 : f32
    %12 = vector.broadcast %cst_5 : f32 to vector<128x128xf32>
    %13 = arith.addf %12, %11 : vector<128x128xf32>
    %14 = arith.divf %12, %13 : vector<128x128xf32>
    %15 = arith.mulf %9, %14 : vector<128x128xf32>
    %16 = arith.negf %15 : vector<128x128xf32>
    %17 = math.exp %16 : vector<128x128xf32>
    %cst_6 = arith.constant 1.000000e+00 : f32
    %18 = vector.broadcast %cst_6 : f32 to vector<128x128xf32>
    %19 = arith.addf %18, %17 : vector<128x128xf32>
    %20 = arith.divf %18, %19 : vector<128x128xf32>
    %21 = arith.mulf %15, %20 : vector<128x128xf32>
    %cst_7 = arith.constant dense<0.000000e+00> : vector<128xf32>
    %22 = vector.multi_reduction <add>, %21, %cst_7 [1] : vector<128x128xf32> to vector<128xf32>
    %23 = vector.shape_cast %22 : vector<128xf32> to vector<128x1xf32>
    %24 = arith.mulf %21, %21 : vector<128x128xf32>
    %cst_8 = arith.constant dense<0.000000e+00> : vector<128xf32>
    %25 = vector.multi_reduction <add>, %24, %cst_8 [1] : vector<128x128xf32> to vector<128xf32>
    %26 = vector.shape_cast %25 : vector<128xf32> to vector<128x1xf32>
    %cst_9 = arith.constant 1.562500e-02 : f32
    %27 = vector.broadcast %cst_9 : f32 to vector<128x1xf32>
    %28 = arith.mulf %23, %27 : vector<128x1xf32>
    %cst_10 = arith.constant 1.562500e-02 : f32
    %29 = vector.broadcast %cst_10 : f32 to vector<128x1xf32>
    %30 = arith.mulf %26, %29 : vector<128x1xf32>
    %31 = arith.mulf %28, %28 : vector<128x1xf32>
    %32 = arith.subf %30, %31 : vector<128x1xf32>
    %33 = vector.broadcast %28 : vector<128x1xf32> to vector<128x128xf32>
    %34 = arith.subf %21, %33 : vector<128x128xf32>
    %cst_11 = arith.constant 9.99999974E-6 : f32
    %35 = vector.broadcast %cst_11 : f32 to vector<128x1xf32>
    %36 = arith.addf %32, %35 : vector<128x1xf32>
    %37 = math.rsqrt %36 : vector<128x1xf32>
    %38 = vector.broadcast %37 : vector<128x1xf32> to vector<128x128xf32>
    %39 = arith.mulf %34, %38 : vector<128x128xf32>
    %40 = vector.broadcast %4 : vector<1x128xf32> to vector<128x128xf32>
    %41 = arith.mulf %39, %40 : vector<128x128xf32>
    %42 = vector.broadcast %5 : vector<1x128xf32> to vector<128x128xf32>
    %43 = arith.addf %41, %42 : vector<128x128xf32>
    %c0_12 = arith.constant 0 : index
    %c0_13 = arith.constant 0 : index
    %44 = vector.load %arg4[%c0_12, %c0_13] : memref<128x128xbf16, #tpu.memory_space<vmem>>, vector<128x128xbf16>
    %c0_14 = arith.constant 0 : index
    %c0_15 = arith.constant 0 : index
    %45 = vector.load %arg5[%c0_14, %c0_15] : memref<3x128xf32, #tpu.memory_space<vmem>>, vector<3x128xf32>
    %46 = vector.extract_strided_slice %45 {offsets = [0, 0], sizes = [1, 128], strides = [1, 1]} : vector<3x128xf32> to vector<1x128xf32>
    %47 = vector.extract_strided_slice %45 {offsets = [1, 0], sizes = [1, 128], strides = [1, 1]} : vector<3x128xf32> to vector<1x128xf32>
    %48 = vector.extract_strided_slice %45 {offsets = [2, 0], sizes = [1, 128], strides = [1, 1]} : vector<3x128xf32> to vector<1x128xf32>
    %49 = arith.truncf %43 : vector<128x128xf32> to vector<128x128xbf16>
    %cst_16 = arith.constant dense<0.000000e+00> : vector<128x128xf32>
    %50 = tpu.matmul %49, %44, %cst_16 {dimension_numbers = #tpu.dot_dimension_numbers<[1], [0], [0], [1], [0, 0, 1, 1], [], []>} : vector<128x128xbf16>, vector<128x128xbf16>, vector<128x128xf32> -> vector<128x128xf32>
    %51 = vector.broadcast %46 : vector<1x128xf32> to vector<128x128xf32>
    %52 = arith.addf %50, %51 : vector<128x128xf32>
    %53 = arith.negf %52 : vector<128x128xf32>
    %54 = math.exp %53 : vector<128x128xf32>
    %cst_17 = arith.constant 1.000000e+00 : f32
    %55 = vector.broadcast %cst_17 : f32 to vector<128x128xf32>
    %56 = arith.addf %55, %54 : vector<128x128xf32>
    %57 = arith.divf %55, %56 : vector<128x128xf32>
    %58 = arith.mulf %52, %57 : vector<128x128xf32>
    %59 = arith.negf %58 : vector<128x128xf32>
    %60 = math.exp %59 : vector<128x128xf32>
    %cst_18 = arith.constant 1.000000e+00 : f32
    %61 = vector.broadcast %cst_18 : f32 to vector<128x128xf32>
    %62 = arith.addf %61, %60 : vector<128x128xf32>
    %63 = arith.divf %61, %62 : vector<128x128xf32>
    %64 = arith.mulf %58, %63 : vector<128x128xf32>
    %cst_19 = arith.constant dense<0.000000e+00> : vector<128xf32>
    %65 = vector.multi_reduction <add>, %64, %cst_19 [1] : vector<128x128xf32> to vector<128xf32>
    %66 = vector.shape_cast %65 : vector<128xf32> to vector<128x1xf32>
    %67 = arith.mulf %64, %64 : vector<128x128xf32>
    %cst_20 = arith.constant dense<0.000000e+00> : vector<128xf32>
    %68 = vector.multi_reduction <add>, %67, %cst_20 [1] : vector<128x128xf32> to vector<128xf32>
    %69 = vector.shape_cast %68 : vector<128xf32> to vector<128x1xf32>
    %cst_21 = arith.constant 3.125000e-02 : f32
    %70 = vector.broadcast %cst_21 : f32 to vector<128x1xf32>
    %71 = arith.mulf %66, %70 : vector<128x1xf32>
    %cst_22 = arith.constant 3.125000e-02 : f32
    %72 = vector.broadcast %cst_22 : f32 to vector<128x1xf32>
    %73 = arith.mulf %69, %72 : vector<128x1xf32>
    %74 = arith.mulf %71, %71 : vector<128x1xf32>
    %75 = arith.subf %73, %74 : vector<128x1xf32>
    %76 = vector.broadcast %71 : vector<128x1xf32> to vector<128x128xf32>
    %77 = arith.subf %64, %76 : vector<128x128xf32>
    %cst_23 = arith.constant 9.99999974E-6 : f32
    %78 = vector.broadcast %cst_23 : f32 to vector<128x1xf32>
    %79 = arith.addf %75, %78 : vector<128x1xf32>
    %80 = math.rsqrt %79 : vector<128x1xf32>
    %81 = vector.broadcast %80 : vector<128x1xf32> to vector<128x128xf32>
    %82 = arith.mulf %77, %81 : vector<128x128xf32>
    %83 = vector.broadcast %47 : vector<1x128xf32> to vector<128x128xf32>
    %84 = arith.mulf %82, %83 : vector<128x128xf32>
    %85 = vector.broadcast %48 : vector<1x128xf32> to vector<128x128xf32>
    %86 = arith.addf %84, %85 : vector<128x128xf32>
    %c0_24 = arith.constant 0 : index
    %c0_25 = arith.constant 0 : index
    %87 = vector.load %arg6[%c0_24, %c0_25] : memref<128x128xbf16, #tpu.memory_space<vmem>>, vector<128x128xbf16>
    %c0_26 = arith.constant 0 : index
    %c0_27 = arith.constant 0 : index
    %88 = vector.load %arg7[%c0_26, %c0_27] : memref<1x128xf32, #tpu.memory_space<vmem>>, vector<1x128xf32>
    %89 = arith.truncf %86 : vector<128x128xf32> to vector<128x128xbf16>
    %cst_28 = arith.constant dense<0.000000e+00> : vector<128x128xf32>
    %90 = tpu.matmul %89, %87, %cst_28 {dimension_numbers = #tpu.dot_dimension_numbers<[1], [0], [0], [1], [0, 0, 1, 1], [], []>} : vector<128x128xbf16>, vector<128x128xbf16>, vector<128x128xf32> -> vector<128x128xf32>
    %91 = vector.broadcast %88 : vector<1x128xf32> to vector<128x128xf32>
    %92 = arith.addf %90, %91 : vector<128x128xf32>
    %c0_29 = arith.constant 0 : index
    %c0_30 = arith.constant 0 : index
    %93 = vector.load %arg8[%c0_29, %c0_30] : memref<128x128xf32, #tpu.memory_space<vmem>>, vector<128x128xf32>
    tpu.vector_store %arg8[%c0_29, %c0_30], %92 {strides = array<i32>} : memref<128x128xf32, #tpu.memory_space<vmem>>, vector<128x128xf32>,
    return
  }
  func.func @transform_0(%arg0: i32) -> (i32, i32) {
    %c0_i32 = arith.constant 0 : i32
    %c0_i32_0 = arith.constant 0 : i32
    return %arg0, %c0_i32 : i32, i32
  }
  func.func @transform_1(%arg0: i32) -> (i32, i32) {
    %c0_i32 = arith.constant 0 : i32
    %c0_i32_0 = arith.constant 0 : i32
    %c0_i32_1 = arith.constant 0 : i32
    return %c0_i32, %c0_i32_0 : i32, i32
  }
  func.func @transform_2(%arg0: i32) -> (i32, i32) {
    %c0_i32 = arith.constant 0 : i32
    %c0_i32_0 = arith.constant 0 : i32
    %c0_i32_1 = arith.constant 0 : i32
    return %c0_i32, %c0_i32_0 : i32, i32
  }
  func.func @transform_3(%arg0: i32) -> (i32, i32) {
    %c0_i32 = arith.constant 0 : i32
    %c0_i32_0 = arith.constant 0 : i32
    %c0_i32_1 = arith.constant 0 : i32
    return %c0_i32, %c0_i32_0 : i32, i32
  }
  func.func @transform_4(%arg0: i32) -> (i32, i32) {
    %c0_i32 = arith.constant 0 : i32
    %c0_i32_0 = arith.constant 0 : i32
    %c0_i32_1 = arith.constant 0 : i32
    return %c0_i32, %c0_i32_0 : i32, i32
  }
  func.func @transform_5(%arg0: i32) -> (i32, i32) {
    %c0_i32 = arith.constant 0 : i32
    %c0_i32_0 = arith.constant 0 : i32
    %c0_i32_1 = arith.constant 0 : i32
    return %c0_i32, %c0_i32_0 : i32, i32
  }
  func.func @transform_6(%arg0: i32) -> (i32, i32) {
    %c0_i32 = arith.constant 0 : i32
    %c0_i32_0 = arith.constant 0 : i32
    %c0_i32_1 = arith.constant 0 : i32
    return %c0_i32, %c0_i32_0 : i32, i32
  }
  func.func @transform_7(%arg0: i32) -> (i32, i32) {
    %c0_i32 = arith.constant 0 : i32
    %c0_i32_0 = arith.constant 0 : i32
    return %arg0, %c0_i32 : i32, i32
  }
}

</mosaic_0001>

<llo_original>
// kernel: tpu_custom_call.1
$region0: #{tpu_custom_call.1}
  #allocation0 [shape = 'u32[]', space=smem, size = 0x4, offset = 0x4, fixed_abs, tag = 'smem constant byte address 0x4 - core index']
  #allocation1 [shape = 'u32[72,128]{1,0:T(1,128)}', space=vmem, size = 0x9000, scoped, tag = 'internal scratch']
  %s0 = inlined_call_operand.hbm [shape: f32[256,128], index: 0, kind: input, shape index: {}]
  %s1 = inlined_call_operand.hbm [shape: bf16[128,128], index: 1, kind: input, shape index: {}]
  %s2 = inlined_call_operand.hbm [shape: f32[3,128], index: 2, kind: input, shape index: {}]
  %s3 = inlined_call_operand.hbm [shape: bf16[128,128], index: 3, kind: input, shape index: {}]
  %s4 = inlined_call_operand.hbm [shape: f32[3,128], index: 4, kind: input, shape index: {}]
  %s5 = inlined_call_operand.hbm [shape: bf16[128,128], index: 5, kind: input, shape index: {}]
  %s6 = inlined_call_operand.vmem [shape: f32[1,128], index: 6, kind: input, shape index: {}]
  %s7 = inlined_call_operand.hbm [shape: f32[256,128], index: 7, kind: output, shape index: {}]
  %s8 = sld [smem:[#allocation0]]
  $region85: #{tpu_custom_call.1} parent=0
    _
  %s10 = ssub.s32 1, %s8
  %s11 = scalar_select 0, %s10, %s8
  $region1: #{tpu_custom_call.1} parent=0
    #allocation2 [shape = 'u8[131072]{0}', space=vmem, size = 0x20000, scoped, tag = 'input window, operand 0']
    #allocation3 [shape = 's32[2]{0}', space=sflag, size = 0x8, scoped, tag = 'scoped memory for tpu_custom_call.1']
    #allocation4 [shape = 's32[2]{0}', space=sflag, size = 0x8, scoped, tag = 'scoped memory for tpu_custom_call.1']
    #allocation5 [shape = 'u8[32768]{0}', space=vmem, size = 0x8000, scoped, tag = 'input window, operand 1, single buffered']
    #allocation6 [shape = 's32[1]{0}', space=sflag, size = 0x4, scoped, tag = 'scoped memory for tpu_custom_call.1']
    #allocation7 [shape = 'u8[2048]{0}', space=vmem, size = 0x800, scoped, tag = 'input window, operand 2, single buffered']
    #allocation8 [shape = 'u8[32768]{0}', space=vmem, size = 0x8000, scoped, tag = 'input window, operand 3, single buffered']
    #allocation9 [shape = 's32[1]{0}', space=sflag, size = 0x4, scoped, tag = 'scoped memory for tpu_custom_call.1']
    #allocation10 [shape = 'u8[2048]{0}', space=vmem, size = 0x800, scoped, tag = 'input window, operand 4, single buffered']
    #allocation11 [shape = 'u8[32768]{0}', space=vmem, size = 0x8000, scoped, tag = 'input window, operand 5, single buffered']
    #allocation12 [shape = 's32[1]{0}', space=sflag, size = 0x4, scoped, tag = 'scoped memory for tpu_custom_call.1']
    #allocation13 [shape = 'u8[131072]{0}', space=vmem, size = 0x20000, scoped, tag = 'output window, operand 0']
    %12 = vsyncpa [#allocation3], 0
    %s13 = scalar_lea.sflag [#allocation3], 1
    %14 = vsyncpa %s13, 0
    %15 = vsyncpa [#allocation6], 0
    %16 = vsyncpa [#allocation9], 0
    %17 = vsyncpa [#allocation12], 0
    %18 = vsyncpa [#allocation4], 0
    %s19 = scalar_lea.sflag [#allocation4], 1
    %20 = vsyncpa %s19, 0
    loop: start=0, step=1, limit=4
    $region2: #{tpu_custom_call.1} parent=1 // loop_pre_header
      _
    $region3: #{tpu_custom_call.1} parent=1 // loop_header
      %s22 = sphi 0, %s26
      %p23 = scmp.ge.s32.totalorder %s22, 4
      %s32 = sphi 0, %s34
      %s35 = sphi 0, %s32
      %s36 = sphi 0, %s35
      %s52 = sphi 0, %s36
      %s56 = sphi 0, %s56
      %s58 = sphi 0, %s56
      %s59 = sphi 0, %s58
      %s73 = sphi 0, %s59
      %s77 = sphi 0, %s77
      %s79 = sphi 0, %s77
      %s80 = sphi 0, %s79
      %s94 = sphi 0, %s80
      %s98 = sphi 0, %s98
      %s100 = sphi 0, %s98
      %s101 = sphi 0, %s100
      %s115 = sphi 0, %s101
      %s119 = sphi 0, %s119
      %s121 = sphi 0, %s119
      %s122 = sphi 0, %s121
      %s136 = sphi 0, %s122
      %s140 = sphi 0, %s140
      %s142 = sphi 0, %s140
      %s143 = sphi 0, %s142
      %s157 = sphi 0, %s143
      %s161 = sphi 0, %s161
      %s163 = sphi 0, %s161
      %s164 = sphi 0, %s163
      %s178 = sphi 0, %s164
      %s184 = sphi 0, %s186
      %s187 = sphi 0, %s184
      %s188 = sphi 0, %s187
      %s204 = sphi 0, %s188
    $region4: #{tpu_custom_call.1} parent=1 // loop_header_branch
      %25 = sbr.rel (%p23) target = $region8
    $region5: #{tpu_custom_call.1} parent=1 // loop_body
      %s27 = ssub.s32 %s22, 1
      %s28 = ssub.s32 %s22, 2
      %s29 = sadd.s32 %s22, 1
      %s30 = ssub.s32 %s22, %s29
      %p31 = scmp.eq.s32.totalorder %s30, 0
      %s33 = sadd.s32 %s32, 1
      %s34 = scalar_select %p31, %s32, %s33
      %p37 = pneg %p31
      %p38 = scmp.eq.s32.totalorder %s22, 1
      %p39 = por %p37, %p38
      %p40 = scmp.ne.s32.totalorder %s32, %s35
      %p41 = scmp.eq.s32.totalorder %s22, 0
      %p42 = por %p40, %p41
      %p43 = scmp.ne.s32.totalorder %s32, %s35
      %p44 = scmp.eq.s32.totalorder %s27, 1
      %p45 = por %p43, %p44
      %p46 = scmp.ne.s32.totalorder %s35, %s36
      %p47 = scmp.eq.s32.totalorder %s27, 0
      %p48 = por %p46, %p47
      %p49 = scmp.ne.s32.totalorder %s35, %s36
      %p50 = scmp.eq.s32.totalorder %s28, 1
      %p51 = por %p49, %p50
      %p53 = scmp.ne.s32.totalorder %s36, %s52
      %p54 = scmp.eq.s32.totalorder %s28, 0
      %p55 = por %p53, %p54
      %s57 = sadd.s32 %s56, 1
      %p60 = scmp.eq.s32.totalorder %s22, 1
      %p61 = scmp.ne.s32.totalorder %s56, %s58
      %p62 = scmp.eq.s32.totalorder %s22, 0
      %p63 = por %p61, %p62
      %p64 = scmp.ne.s32.totalorder %s56, %s58
      %p65 = scmp.eq.s32.totalorder %s27, 1
      %p66 = por %p64, %p65
      %p67 = scmp.ne.s32.totalorder %s58, %s59
      %p68 = scmp.eq.s32.totalorder %s27, 0
      %p69 = por %p67, %p68
      %p70 = scmp.ne.s32.totalorder %s58, %s59
      %p71 = scmp.eq.s32.totalorder %s28, 1
      %p72 = por %p70, %p71
      %p74 = scmp.ne.s32.totalorder %s59, %s73
      %p75 = scmp.eq.s32.totalorder %s28, 0
      %p76 = por %p74, %p75
      %s78 = sadd.s32 %s77, 1
      %p81 = scmp.eq.s32.totalorder %s22, 1
      %p82 = scmp.ne.s32.totalorder %s77, %s79
      %p83 = scmp.eq.s32.totalorder %s22, 0
      %p84 = por %p82, %p83
      %p85 = scmp.ne.s32.totalorder %s77, %s79
      %p86 = scmp.eq.s32.totalorder %s27, 1
      %p87 = por %p85, %p86
      %p88 = scmp.ne.s32.totalorder %s79, %s80
      %p89 = scmp.eq.s32.totalorder %s27, 0
      %p90 = por %p88, %p89
      %p91 = scmp.ne.s32.totalorder %s79, %s80
      %p92 = scmp.eq.s32.totalorder %s28, 1
      %p93 = por %p91, %p92
      %p95 = scmp.ne.s32.totalorder %s80, %s94
      %p96 = scmp.eq.s32.totalorder %s28, 0
      %p97 = por %p95, %p96
      %s99 = sadd.s32 %s98, 1
      %p102 = scmp.eq.s32.totalorder %s22, 1
      %p103 = scmp.ne.s32.totalorder %s98, %s100
      %p104 = scmp.eq.s32.totalorder %s22, 0
      %p105 = por %p103, %p104
      %p106 = scmp.ne.s32.totalorder %s98, %s100
      %p107 = scmp.eq.s32.totalorder %s27, 1
      %p108 = por %p106, %p107
      %p109 = scmp.ne.s32.totalorder %s100, %s101
      %p110 = scmp.eq.s32.totalorder %s27, 0
      %p111 = por %p109, %p110
      %p112 = scmp.ne.s32.totalorder %s100, %s101
      %p113 = scmp.eq.s32.totalorder %s28, 1
      %p114 = por %p112, %p113
      %p116 = scmp.ne.s32.totalorder %s101, %s115
      %p117 = scmp.eq.s32.totalorder %s28, 0
      %p118 = por %p116, %p117
      %s120 = sadd.s32 %s119, 1
      %p123 = scmp.eq.s32.totalorder %s22, 1
      %p124 = scmp.ne.s32.totalorder %s119, %s121
      %p125 = scmp.eq.s32.totalorder %s22, 0
      %p126 = por %p124, %p125
      %p127 = scmp.ne.s32.totalorder %s119, %s121
      %p128 = scmp.eq.s32.totalorder %s27, 1
      %p129 = por %p127, %p128
      %p130 = scmp.ne.s32.totalorder %s121, %s122
      %p131 = scmp.eq.s32.totalorder %s27, 0
      %p132 = por %p130, %p131
      %p133 = scmp.ne.s32.totalorder %s121, %s122
      %p134 = scmp.eq.s32.totalorder %s28, 1
      %p135 = por %p133, %p134
      %p137 = scmp.ne.s32.totalorder %s122, %s136
      %p138 = scmp.eq.s32.totalorder %s28, 0
      %p139 = por %p137, %p138
      %s141 = sadd.s32 %s140, 1
      %p144 = scmp.eq.s32.totalorder %s22, 1
      %p145 = scmp.ne.s32.totalorder %s140, %s142
      %p146 = scmp.eq.s32.totalorder %s22, 0
      %p147 = por %p145, %p146
      %p148 = scmp.ne.s32.totalorder %s140, %s142
      %p149 = scmp.eq.s32.totalorder %s27, 1
      %p150 = por %p148, %p149
      %p151 = scmp.ne.s32.totalorder %s142, %s143
      %p152 = scmp.eq.s32.totalorder %s27, 0
      %p153 = por %p151, %p152
      %p154 = scmp.ne.s32.totalorder %s142, %s143
      %p155 = scmp.eq.s32.totalorder %s28, 1
      %p156 = por %p154, %p155
      %p158 = scmp.ne.s32.totalorder %s143, %s157
      %p159 = scmp.eq.s32.totalorder %s28, 0
      %p160 = por %p158, %p159
      %s162 = sadd.s32 %s161, 1
      %p165 = scmp.eq.s32.totalorder %s22, 1
      %p166 = scmp.ne.s32.totalorder %s161, %s163
      %p167 = scmp.eq.s32.totalorder %s22, 0
      %p168 = por %p166, %p167
      %p169 = scmp.ne.s32.totalorder %s161, %s163
      %p170 = scmp.eq.s32.totalorder %s27, 1
      %p171 = por %p169, %p170
      %p172 = scmp.ne.s32.totalorder %s163, %s164
      %p173 = scmp.eq.s32.totalorder %s27, 0
      %p174 = por %p172, %p173
      %p175 = scmp.ne.s32.totalorder %s163, %s164
      %p176 = scmp.eq.s32.totalorder %s28, 1
      %p177 = por %p175, %p176
      %p179 = scmp.ne.s32.totalorder %s164, %s178
      %p180 = scmp.eq.s32.totalorder %s28, 0
      %p181 = por %p179, %p180
      %s182 = ssub.s32 %s22, %s29
      %p183 = scmp.eq.s32.totalorder %s182, 0
      %s185 = sadd.s32 %s184, 1
      %s186 = scalar_select %p183, %s184, %s185
      %p189 = pneg %p183
      %p190 = scmp.eq.s32.totalorder %s22, 1
      %p191 = por %p189, %p190
      %p192 = scmp.ne.s32.totalorder %s184, %s187
      %p193 = scmp.eq.s32.totalorder %s22, 0
      %p194 = por %p192, %p193
      %p195 = scmp.ne.s32.totalorder %s184, %s187
      %p196 = scmp.eq.s32.totalorder %s27, 1
      %p197 = por %p195, %p196
      %p198 = scmp.ne.s32.totalorder %s187, %s188
      %p199 = scmp.eq.s32.totalorder %s27, 0
      %p200 = por %p198, %p199
      %p201 = scmp.ne.s32.totalorder %s187, %s188
      %p202 = scmp.eq.s32.totalorder %s28, 1
      %p203 = por %p201, %p202
      %p205 = scmp.ne.s32.totalorder %s188, %s204
      %p206 = scmp.eq.s32.totalorder %s28, 0
      %p207 = por %p205, %p206
      %p208 = scmp.le.s32.totalorder 1, %s22
      %p209 = scmp.lt.s32.totalorder %s22, 3
      %p210 = pnand %p208, %p209
      %p211 = pneg %p210
      // Predicated region
      $region9: #{tpu_custom_call.1} parent=5 // pred_check
        _
      $region10: #{tpu_custom_call.1} parent=5 // pred_check_branch
        %213 = sbr.rel (%p210) target = $region12
      $region11: #{tpu_custom_call.1} parent=5 // pred_region
        %s214 = ssub.s32 %s22, 1
        // Predicated region
        $region13: #{tpu_custom_call.1} parent=11 // pred_check
          %p215 = pneg %p69
        $region14: #{tpu_custom_call.1} parent=11 // pred_check_branch
          %217 = sbr.rel (%p215) target = $region16
        $region15: #{tpu_custom_call.1} parent=11 // pred_region
          %219 = vsyncadd [#allocation6], 0
          %s220 = sshll.u32 %s1, 4
          %s221 = int_to_ptr.hbm [resolvable:$true] %s220
          %s222 = sshll.u32 [#allocation5], 4
          %s223 = int_to_ptr.vmem [resolvable:$true] %s222
          %228 = dma.hbm_to_vmem [thread:$0]  %s221, 1024, %s223, [#allocation6], 64, 64, 4
        $region16: #{tpu_custom_call.1} parent=11 // pred_fallthru
          _
        // Predicated region
        $region17: #{tpu_custom_call.1} parent=11 // pred_check
          %p229 = pneg %p90
        $region18: #{tpu_custom_call.1} parent=11 // pred_check_branch
          %231 = sbr.rel (%p229) target = $region20
        $region19: #{tpu_custom_call.1} parent=11 // pred_region
          %233 = vsyncadd [#allocation6], 0
          %s235 = sshll.u32 %s2, 4
          %s236 = int_to_ptr.hbm [resolvable:$true] %s235
          %s237 = sshll.u32 [#allocation7], 4
          %s238 = int_to_ptr.vmem [resolvable:$true] %s237
          %240 = dma.hbm_to_vmem [thread:$0]  %s236, 64, %s238, [#allocation6]
        $region20: #{tpu_custom_call.1} parent=11 // pred_fallthru
          _
        // Predicated region
        $region21: #{tpu_custom_call.1} parent=11 // pred_check
          %p241 = pneg %p111
        $region22: #{tpu_custom_call.1} parent=11 // pred_check_branch
          %243 = sbr.rel (%p241) target = $region24
        $region23: #{tpu_custom_call.1} parent=11 // pred_region
          %245 = vsyncadd [#allocation9], 0
          %s246 = sshll.u32 %s3, 4
          %s247 = int_to_ptr.hbm [resolvable:$true] %s246
          %s248 = sshll.u32 [#allocation8], 4
          %s249 = int_to_ptr.vmem [resolvable:$true] %s248
          %254 = dma.hbm_to_vmem [thread:$0]  %s247, 1024, %s249, [#allocation9], 64, 64, 4
        $region24: #{tpu_custom_call.1} parent=11 // pred_fallthru
          _
        // Predicated region
        $region25: #{tpu_custom_call.1} parent=11 // pred_check
          %p255 = pneg %p132
        $region26: #{tpu_custom_call.1} parent=11 // pred_check_branch
          %257 = sbr.rel (%p255) target = $region28
        $region27: #{tpu_custom_call.1} parent=11 // pred_region
          %259 = vsyncadd [#allocation9], 0
          %s261 = sshll.u32 %s4, 4
          %s262 = int_to_ptr.hbm [resolvable:$true] %s261
          %s263 = sshll.u32 [#allocation10], 4
          %s264 = int_to_ptr.vmem [resolvable:$true] %s263
          %266 = dma.hbm_to_vmem [thread:$0]  %s262, 64, %s264, [#allocation9]
        $region28: #{tpu_custom_call.1} parent=11 // pred_fallthru
          _
        // Predicated region
        $region29: #{tpu_custom_call.1} parent=11 // pred_check
          %p267 = pneg %p153
        $region30: #{tpu_custom_call.1} parent=11 // pred_check_branch
          %269 = sbr.rel (%p267) target = $region32
        $region31: #{tpu_custom_call.1} parent=11 // pred_region
          %271 = vsyncadd [#allocation12], 0
          %s272 = sshll.u32 %s5, 4
          %s273 = int_to_ptr.hbm [resolvable:$true] %s272
          %s274 = sshll.u32 [#allocation11], 4
          %s275 = int_to_ptr.vmem [resolvable:$true] %s274
          %280 = dma.hbm_to_vmem [thread:$0]  %s273, 1024, %s275, [#allocation12], 64, 64, 4
        $region32: #{tpu_custom_call.1} parent=11 // pred_fallthru
          _
        // Predicated region
        $region33: #{tpu_custom_call.1} parent=11 // pred_check
          %p281 = pneg %p174
        $region34: #{tpu_custom_call.1} parent=11 // pred_check_branch
          %283 = sbr.rel (%p281) target = $region36
        $region35: #{tpu_custom_call.1} parent=11 // pred_region
          _
        $region36: #{tpu_custom_call.1} parent=11 // pred_fallthru
          _
      $region12: #{tpu_custom_call.1} parent=5 // pred_fallthru
        _
      %p284 = scmp.lt.s32.totalorder %s22, 2
      // Predicated region
      $region37: #{tpu_custom_call.1} parent=5 // pred_check
        %p285 = pneg %p284
      $region38: #{tpu_custom_call.1} parent=5 // pred_check_branch
        %287 = sbr.rel (%p285) target = $region40
      $region39: #{tpu_custom_call.1} parent=5 // pred_region
        // Predicated region
        $region41: #{tpu_custom_call.1} parent=39 // pred_check
          %p288 = pneg %p42
        $region42: #{tpu_custom_call.1} parent=39 // pred_check_branch
          %290 = sbr.rel (%p288) target = $region44
        $region43: #{tpu_custom_call.1} parent=39 // pred_region
          %s291 = sand.u32 %s32, 1
          %s292 = scalar_lea.sflag [#allocation3], %s291
          %s293 = sand.u32 %s32, 1
          %s294 = smul.addr %s293, 128
          %s295 = scalar_lea.vmem [#allocation2], %s294
          %s296 = smul.u32 16, %s22
          %298 = vsyncadd %s292, 0
          %s299 = smul.addr %s296, 8
          %s300 = scalar_lea.hbm %s0, %s299
          %s301 = sshll.u32 %s300, 4
          %s302 = int_to_ptr.hbm [resolvable:$true] %s301
          %s303 = sshll.u32 %s295, 4
          %s304 = int_to_ptr.vmem [resolvable:$true] %s303
          %309 = dma.hbm_to_vmem [thread:$0]  %s302, 2048, %s304, %s292, 128, 128, 8
        $region44: #{tpu_custom_call.1} parent=39 // pred_fallthru
          _
      $region40: #{tpu_custom_call.1} parent=5 // pred_fallthru
        _
      %p310 = scmp.le.s32.totalorder 1, %s22
      %p311 = scmp.lt.s32.totalorder %s22, 3
      %p312 = pnand %p310, %p311
      %p313 = pneg %p312
      // Predicated region
      $region45: #{tpu_custom_call.1} parent=5 // pred_check
        _
      $region46: #{tpu_custom_call.1} parent=5 // pred_check_branch
        %315 = sbr.rel (%p312) target = $region48
      $region47: #{tpu_custom_call.1} parent=5 // pred_region
        %s316 = ssub.s32 %s22, 1
        %s317 = sand.u32 %s35, 1
        %s318 = scalar_lea.sflag [#allocation3], %s317
        %s319 = sand.u32 %s35, 1
        %s320 = smul.addr %s319, 128
        %s321 = scalar_lea.vmem [#allocation2], %s320
        // Predicated region
        $region49: #{tpu_custom_call.1} parent=47 // pred_check
          %p322 = pneg %p48
        $region50: #{tpu_custom_call.1} parent=47 // pred_check_branch
          %324 = sbr.rel (%p322) target = $region52
        $region51: #{tpu_custom_call.1} parent=47 // pred_region
          %326 = dma.done %s318, 2048
        $region52: #{tpu_custom_call.1} parent=47 // pred_fallthru
          _
        // Predicated region
        $region53: #{tpu_custom_call.1} parent=47 // pred_check
          %p327 = pneg %p69
        $region54: #{tpu_custom_call.1} parent=47 // pred_check_branch
          %329 = sbr.rel (%p327) target = $region56
        $region55: #{tpu_custom_call.1} parent=47 // pred_region
          %331 = dma.done [#allocation6], 1024
        $region56: #{tpu_custom_call.1} parent=47 // pred_fallthru
          _
        // Predicated region
        $region57: #{tpu_custom_call.1} parent=47 // pred_check
          %p332 = pneg %p90
        $region58: #{tpu_custom_call.1} parent=47 // pred_check_branch
          %334 = sbr.rel (%p332) target = $region60
        $region59: #{tpu_custom_call.1} parent=47 // pred_region
          %336 = dma.done [#allocation6], 64
        $region60: #{tpu_custom_call.1} parent=47 // pred_fallthru
          _
        // Predicated region
        $region61: #{tpu_custom_call.1} parent=47 // pred_check
          %p337 = pneg %p111
        $region62: #{tpu_custom_call.1} parent=47 // pred_check_branch
          %339 = sbr.rel (%p337) target = $region64
        $region63: #{tpu_custom_call.1} parent=47 // pred_region
          %341 = dma.done [#allocation9], 1024
        $region64: #{tpu_custom_call.1} parent=47 // pred_fallthru
          _
        // Predicated region
        $region65: #{tpu_custom_call.1} parent=47 // pred_check
          %p342 = pneg %p132
        $region66: #{tpu_custom_call.1} parent=47 // pred_check_branch
          %344 = sbr.rel (%p342) target = $region68
        $region67: #{tpu_custom_call.1} parent=47 // pred_region
          %346 = dma.done [#allocation9], 64
        $region68: #{tpu_custom_call.1} parent=47 // pred_fallthru
          _
        // Predicated region
        $region69: #{tpu_custom_call.1} parent=47 // pred_check
          %p347 = pneg %p153
        $region70: #{tpu_custom_call.1} parent=47 // pred_check_branch
          %349 = sbr.rel (%p347) target = $region72
        $region71: #{tpu_custom_call.1} parent=47 // pred_region
          %351 = dma.done [#allocation12], 1024
        $region72: #{tpu_custom_call.1} parent=47 // pred_fallthru
          _
        %s352 = sand.u32 %s35, 1
        %s353 = scalar_lea.sflag [#allocation3], %s352
        %s354 = sand.u32 %s35, 1
        %s355 = smul.addr %s354, 128
        %s356 = scalar_lea.vmem [#allocation2], %s355
        %p357 = pneg %p48
        %p358 = pneg %p45
        %p359 = pneg %p69
        %p360 = pneg %p66
        %p361 = pneg %p90
        %p362 = pneg %p87
        %p363 = pneg %p111
        %p364 = pneg %p108
        %p365 = pneg %p132
        %p366 = pneg %p129
        %p367 = pneg %p153
        %p368 = pneg %p150
        %p369 = pneg %p174
        %p370 = pneg %p171
        %p371 = pneg %p200
        %p372 = pneg %p197
        %s373 = sand.u32 %s187, 1
        %s374 = scalar_lea.sflag [#allocation4], %s373
        %s375 = sand.u32 %s187, 1
        %s376 = smul.addr %s375, 128
        %s377 = scalar_lea.vmem [#allocation13], %s376
        %s378 = smul.u32 16, %s27
        %s379 = smul.u32 16, %s27
        %v380 = vld [vmem:[%s321] sm:$0xff]
        %v381 = vld [vmem:[%s321 + $0x8] sm:$0xff]
        %v382 = vld [vmem:[%s321 + $0x10] sm:$0xff]
        %v383 = vld [vmem:[%s321 + $0x18] sm:$0xff]
        %v384 = vld [vmem:[%s321 + $0x20] sm:$0xff]
        %v385 = vld [vmem:[%s321 + $0x28] sm:$0xff]
        %v386 = vld [vmem:[%s321 + $0x30] sm:$0xff]
        %v387 = vld [vmem:[%s321 + $0x38] sm:$0xff]
        %v388 = vld [vmem:[%s321 + $0x40] sm:$0xff]
        %v389 = vld [vmem:[%s321 + $0x48] sm:$0xff]
        %v390 = vld [vmem:[%s321 + $0x50] sm:$0xff]
        %v391 = vld [vmem:[%s321 + $0x58] sm:$0xff]
        %v392 = vld [vmem:[%s321 + $0x60] sm:$0xff]
        %v393 = vld [vmem:[%s321 + $0x68] sm:$0xff]
        %v394 = vld [vmem:[%s321 + $0x70] sm:$0xff]
        %v395 = vld [vmem:[%s321 + $0x78] sm:$0xff]
        %v396 = vld [vmem:[#allocation5] sm:$0xf]
        %v397 = vld [vmem:[#allocation5 + $0x4] sm:$0xf]
        %v398 = vld [vmem:[#allocation5 + $0x8] sm:$0xf]
        %v399 = vld [vmem:[#allocation5 + $0xc] sm:$0xf]
        %v400 = vld [vmem:[#allocation5 + $0x10] sm:$0xf]
        %v401 = vld [vmem:[#allocation5 + $0x14] sm:$0xf]
        %v402 = vld [vmem:[#allocation5 + $0x18] sm:$0xf]
        %v403 = vld [vmem:[#allocation5 + $0x1c] sm:$0xf]
        %v404 = vld [vmem:[#allocation5 + $0x20] sm:$0xf]
        %v405 = vld [vmem:[#allocation5 + $0x24] sm:$0xf]
        %v406 = vld [vmem:[#allocation5 + $0x28] sm:$0xf]
        %v407 = vld [vmem:[#allocation5 + $0x2c] sm:$0xf]
        %v408 = vld [vmem:[#allocation5 + $0x30] sm:$0xf]
        %v409 = vld [vmem:[#allocation5 + $0x34] sm:$0xf]
        %v410 = vld [vmem:[#allocation5 + $0x38] sm:$0xf]
        %v411 = vld [vmem:[#allocation5 + $0x3c] sm:$0xf]
        %v412 = vld [vmem:[#allocation7] sm:$0x7]
        %v413 = vpack.c.bf16 %v381, %v380
        %v414 = vpack.c.bf16 %v383, %v382
        %v415 = vpack.c.bf16 %v385, %v384
        %v416 = vpack.c.bf16 %v387, %v386
        %v417 = vpack.c.bf16 %v389, %v388
        %v418 = vpack.c.bf16 %v391, %v390
        %v419 = vpack.c.bf16 %v393, %v392
        %v420 = vpack.c.bf16 %v395, %v394
        %v421 = vperm.slane %v412, 0
        %v438 = vunpack.c.l.b16 %v396
        %v439 = vunpack.c.l.b16 %v397
        %v440 = vunpack.c.l.b16 %v398
        %v441 = vunpack.c.l.b16 %v399
        %v442 = vunpack.c.l.b16 %v400
        %v443 = vunpack.c.l.b16 %v401
        %v444 = vunpack.c.l.b16 %v402
        %v445 = vunpack.c.l.b16 %v403
        %v446 = vunpack.c.l.b16 %v404
        %v447 = vunpack.c.l.b16 %v405
        %v448 = vunpack.c.l.b16 %v406
        %v449 = vunpack.c.l.b16 %v407
        %v450 = vunpack.c.l.b16 %v408
        %v451 = vunpack.c.l.b16 %v409
        %v452 = vunpack.c.l.b16 %v410
        %v453 = vunpack.c.l.b16 %v411
        %v454 = vpack.c.b16 %v439, %v438
        %v455 = vpack.c.b16 %v441, %v440
        %v456 = vpack.c.b16 %v443, %v442
        %v457 = vpack.c.b16 %v445, %v444
        %v458 = vpack.c.b16 %v447, %v446
        %v459 = vpack.c.b16 %v449, %v448
        %v460 = vpack.c.b16 %v451, %v450
        %v461 = vpack.c.b16 %v453, %v452
        %470 = vmatpush.bf16.msra.mxu0 %v461
        %471 = vmatpush.bf16.msra.mxu0 %v460
        %472 = vmatpush.bf16.msra.mxu0 %v459
        %473 = vmatpush.bf16.msra.mxu0 %v458
        %474 = vmatpush.bf16.msra.mxu0 %v457
        %475 = vmatpush.bf16.msra.mxu0 %v456
        %476 = vmatpush.bf16.msra.mxu0 %v455
        %477 = vmatpush.bf16.msra.mxu0 %v454
        %478 = vmatmul.bf16.gmra.mxu0 %v413
        %v479 = vpop.f32.mrf.mxu0
        %v480 = vadd.f32 %v421, %v479
        %v481 = vpop.f32.mrf.mxu0
        %v482 = vadd.f32 %v421, %v481
        %483 = vmatmul.bf16.gmra.mxu0 %v414
        %v484 = vpop.f32.mrf.mxu0
        %v485 = vadd.f32 %v421, %v484
        %v486 = vpop.f32.mrf.mxu0
        %v487 = vadd.f32 %v421, %v486
        %488 = vmatmul.bf16.gmra.mxu0 %v415
        %v489 = vpop.f32.mrf.mxu0
        %v490 = vadd.f32 %v421, %v489
        %v491 = vpop.f32.mrf.mxu0
        %v492 = vadd.f32 %v421, %v491
        %493 = vmatmul.bf16.gmra.mxu0 %v416
        %v494 = vpop.f32.mrf.mxu0
        %v495 = vadd.f32 %v421, %v494
        %v496 = vpop.f32.mrf.mxu0
        %v497 = vadd.f32 %v421, %v496
        %498 = vmatmul.bf16.gmra.mxu0 %v417
        %v499 = vpop.f32.mrf.mxu0
        %v500 = vadd.f32 %v421, %v499
        %v501 = vpop.f32.mrf.mxu0
        %v502 = vadd.f32 %v421, %v501
        %503 = vmatmul.bf16.gmra.mxu0 %v418
        %v504 = vpop.f32.mrf.mxu0
        %v505 = vadd.f32 %v421, %v504
        %v506 = vpop.f32.mrf.mxu0
        %v507 = vadd.f32 %v421, %v506
        %508 = vmatmul.bf16.gmra.mxu0 %v419
        %v509 = vpop.f32.mrf.mxu0
        %v510 = vadd.f32 %v421, %v509
        %v511 = vpop.f32.mrf.mxu0
        %v512 = vadd.f32 %v421, %v511
        %513 = vmatmul.bf16.gmra.mxu0 %v420
        %v514 = vpop.f32.mrf.mxu0
        %v515 = vadd.f32 %v421, %v514
        %v516 = vpop.f32.mrf.mxu0
        %v517 = vadd.f32 %v421, %v516
        %518 = vdwg.mxu0
        %v519 = vxor.u32 %v480, 2147483648
        %v520 = vxor.u32 %v482, 2147483648
        %v521 = vxor.u32 %v485, 2147483648
        %v522 = vxor.u32 %v487, 2147483648
        %v523 = vxor.u32 %v490, 2147483648
        %v524 = vxor.u32 %v492, 2147483648
        %v525 = vxor.u32 %v495, 2147483648
        %v526 = vxor.u32 %v497, 2147483648
        %v527 = vxor.u32 %v500, 2147483648
        %v528 = vxor.u32 %v502, 2147483648
        %v529 = vxor.u32 %v505, 2147483648
        %v530 = vxor.u32 %v507, 2147483648
        %v531 = vxor.u32 %v510, 2147483648
        %v532 = vxor.u32 %v512, 2147483648
        %v533 = vxor.u32 %v515, 2147483648
        %v534 = vxor.u32 %v517, 2147483648
        %v535 = vmul.f32 %v519, 1.442695
        %v536 = vpow.pop %v535
        %v537 = vmul.f32 %v520, 1.442695
        %v538 = vpow.pop %v537
        %v539 = vmul.f32 %v521, 1.442695
        %v540 = vpow.pop %v539
        %v541 = vmul.f32 %v522, 1.442695
        %v542 = vpow.pop %v541
        %v543 = vmul.f32 %v523, 1.442695
        %v544 = vpow.pop %v543
        %v545 = vmul.f32 %v524, 1.442695
        %v546 = vpow.pop %v545
        %v547 = vmul.f32 %v525, 1.442695
        %v548 = vpow.pop %v547
        %v549 = vmul.f32 %v526, 1.442695
        %v550 = vpow.pop %v549
        %v551 = vmul.f32 %v527, 1.442695
        %v552 = vpow.pop %v551
        %v553 = vmul.f32 %v528, 1.442695
        %v554 = vpow.pop %v553
        %v555 = vmul.f32 %v529, 1.442695
        %v556 = vpow.pop %v555
        %v557 = vmul.f32 %v530, 1.442695
        %v558 = vpow.pop %v557
        %v559 = vmul.f32 %v531, 1.442695
        %v560 = vpow.pop %v559
        %v561 = vmul.f32 %v532, 1.442695
        %v562 = vpow.pop %v561
        %v563 = vmul.f32 %v533, 1.442695
        %v564 = vpow.pop %v563
        %v565 = vmul.f32 %v534, 1.442695
        %v566 = vpow.pop %v565
        %v567 = vadd.f32 %v536, 1.0
        %v568 = vadd.f32 %v538, 1.0
        %v569 = vadd.f32 %v540, 1.0
        %v570 = vadd.f32 %v542, 1.0
        %v571 = vadd.f32 %v544, 1.0
        %v572 = vadd.f32 %v546, 1.0
        %v573 = vadd.f32 %v548, 1.0
        %v574 = vadd.f32 %v550, 1.0
        %v575 = vadd.f32 %v552, 1.0
        %v576 = vadd.f32 %v554, 1.0
        %v577 = vadd.f32 %v556, 1.0
        %v578 = vadd.f32 %v558, 1.0
        %v579 = vadd.f32 %v560, 1.0
        %v580 = vadd.f32 %v562, 1.0
        %v581 = vadd.f32 %v564, 1.0
        %v582 = vadd.f32 %v566, 1.0
        %v583 = vrcp.pop %v567
        %v584 = vmul.f32 %v567, %v583
        %v585 = vsub.f32 1.0, %v584
        %v586 = vmul.f32 %v583, %v585
        %v587 = vadd.f32 %v583, %v586
        %vm588 = vweird.f32 %v567
        %vm589 = vweird.f32 %v583
        %vm590 = vmor %vm588, %vm589
        %v591 = vsel %vm590, %v583, %v587
        %v592 = vand.u32 2147483647, %v567
        %vm593 = vcmp.eq.f32.partialorder %v592, 8.507059e+37
        %v594 = vand.u32 %v567, 2147483648
        %v595 = vor.u32 1.1754944e-38, %v594
        %v596 = vsel %vm593, %v595, %v591
        %v597 = vmul.f32 1.0, %v596
        %v598 = vrcp.pop %v568
        %v599 = vmul.f32 %v568, %v598
        %v600 = vsub.f32 1.0, %v599
        %v601 = vmul.f32 %v598, %v600
        %v602 = vadd.f32 %v598, %v601
        %vm603 = vweird.f32 %v568
        %vm604 = vweird.f32 %v598
        %vm605 = vmor %vm603, %vm604
        %v606 = vsel %vm605, %v598, %v602
        %v607 = vand.u32 2147483647, %v568
        %vm608 = vcmp.eq.f32.partialorder %v607, 8.507059e+37
        %v609 = vand.u32 %v568, 2147483648
        %v610 = vor.u32 1.1754944e-38, %v609
        %v611 = vsel %vm608, %v610, %v606
        %v612 = vmul.f32 1.0, %v611
        %v613 = vrcp.pop %v569
        %v614 = vmul.f32 %v569, %v613
        %v615 = vsub.f32 1.0, %v614
        %v616 = vmul.f32 %v613, %v615
        %v617 = vadd.f32 %v613, %v616
        %vm618 = vweird.f32 %v569
        %vm619 = vweird.f32 %v613
        %vm620 = vmor %vm618, %vm619
        %v621 = vsel %vm620, %v613, %v617
        %v622 = vand.u32 2147483647, %v569
        %vm623 = vcmp.eq.f32.partialorder %v622, 8.507059e+37
        %v624 = vand.u32 %v569, 2147483648
        %v625 = vor.u32 1.1754944e-38, %v624
        %v626 = vsel %vm623, %v625, %v621
        %v627 = vmul.f32 1.0, %v626
        %v628 = vrcp.pop %v570
        %v629 = vmul.f32 %v570, %v628
        %v630 = vsub.f32 1.0, %v629
        %v631 = vmul.f32 %v628, %v630
        %v632 = vadd.f32 %v628, %v631
        %vm633 = vweird.f32 %v570
        %vm634 = vweird.f32 %v628
        %vm635 = vmor %vm633, %vm634
        %v636 = vsel %vm635, %v628, %v632
        %v637 = vand.u32 2147483647, %v570
        %vm638 = vcmp.eq.f32.partialorder %v637, 8.507059e+37
        %v639 = vand.u32 %v570, 2147483648
        %v640 = vor.u32 1.1754944e-38, %v639
        %v641 = vsel %vm638, %v640, %v636
        %v642 = vmul.f32 1.0, %v641
        %v643 = vrcp.pop %v571
        %v644 = vmul.f32 %v571, %v643
        %v645 = vsub.f32 1.0, %v644
        %v646 = vmul.f32 %v643, %v645
        %v647 = vadd.f32 %v643, %v646
        %vm648 = vweird.f32 %v571
        %vm649 = vweird.f32 %v643
        %vm650 = vmor %vm648, %vm649
        %v651 = vsel %vm650, %v643, %v647
        %v652 = vand.u32 2147483647, %v571
        %vm653 = vcmp.eq.f32.partialorder %v652, 8.507059e+37
        %v654 = vand.u32 %v571, 2147483648
        %v655 = vor.u32 1.1754944e-38, %v654
        %v656 = vsel %vm653, %v655, %v651
        %v657 = vmul.f32 1.0, %v656
        %v658 = vrcp.pop %v572
        %v659 = vmul.f32 %v572, %v658
        %v660 = vsub.f32 1.0, %v659
        %v661 = vmul.f32 %v658, %v660
        %v662 = vadd.f32 %v658, %v661
        %vm663 = vweird.f32 %v572
        %vm664 = vweird.f32 %v658
        %vm665 = vmor %vm663, %vm664
        %v666 = vsel %vm665, %v658, %v662
        %v667 = vand.u32 2147483647, %v572
        %vm668 = vcmp.eq.f32.partialorder %v667, 8.507059e+37
        %v669 = vand.u32 %v572, 2147483648
        %v670 = vor.u32 1.1754944e-38, %v669
        %v671 = vsel %vm668, %v670, %v666
        %v672 = vmul.f32 1.0, %v671
        %v673 = vrcp.pop %v573
        %v674 = vmul.f32 %v573, %v673
        %v675 = vsub.f32 1.0, %v674
        %v676 = vmul.f32 %v673, %v675
        %v677 = vadd.f32 %v673, %v676
        %vm678 = vweird.f32 %v573
        %vm679 = vweird.f32 %v673
        %vm680 = vmor %vm678, %vm679
        %v681 = vsel %vm680, %v673, %v677
        %v682 = vand.u32 2147483647, %v573
        %vm683 = vcmp.eq.f32.partialorder %v682, 8.507059e+37
        %v684 = vand.u32 %v573, 2147483648
        %v685 = vor.u32 1.1754944e-38, %v684
        %v686 = vsel %vm683, %v685, %v681
        %v687 = vmul.f32 1.0, %v686
        %v688 = vrcp.pop %v574
        %v689 = vmul.f32 %v574, %v688
        %v690 = vsub.f32 1.0, %v689
        %v691 = vmul.f32 %v688, %v690
        %v692 = vadd.f32 %v688, %v691
        %vm693 = vweird.f32 %v574
        %vm694 = vweird.f32 %v688
        %vm695 = vmor %vm693, %vm694
        %v696 = vsel %vm695, %v688, %v692
        %v697 = vand.u32 2147483647, %v574
        %vm698 = vcmp.eq.f32.partialorder %v697, 8.507059e+37
        %v699 = vand.u32 %v574, 2147483648
        %v700 = vor.u32 1.1754944e-38, %v699
        %v701 = vsel %vm698, %v700, %v696
        %v702 = vmul.f32 1.0, %v701
        %v703 = vrcp.pop %v575
        %v704 = vmul.f32 %v575, %v703
        %v705 = vsub.f32 1.0, %v704
        %v706 = vmul.f32 %v703, %v705
        %v707 = vadd.f32 %v703, %v706
        %vm708 = vweird.f32 %v575
        %vm709 = vweird.f32 %v703
        %vm710 = vmor %vm708, %vm709
        %v711 = vsel %vm710, %v703, %v707
        %v712 = vand.u32 2147483647, %v575
        %vm713 = vcmp.eq.f32.partialorder %v712, 8.507059e+37
        %v714 = vand.u32 %v575, 2147483648
        %v715 = vor.u32 1.1754944e-38, %v714
        %v716 = vsel %vm713, %v715, %v711
        %v717 = vmul.f32 1.0, %v716
        %v718 = vrcp.pop %v576
        %v719 = vmul.f32 %v576, %v718
        %v720 = vsub.f32 1.0, %v719
        %v721 = vmul.f32 %v718, %v720
        %v722 = vadd.f32 %v718, %v721
        %vm723 = vweird.f32 %v576
        %vm724 = vweird.f32 %v718
        %vm725 = vmor %vm723, %vm724
        %v726 = vsel %vm725, %v718, %v722
        %v727 = vand.u32 2147483647, %v576
        %vm728 = vcmp.eq.f32.partialorder %v727, 8.507059e+37
        %v729 = vand.u32 %v576, 2147483648
        %v730 = vor.u32 1.1754944e-38, %v729
        %v731 = vsel %vm728, %v730, %v726
        %v732 = vmul.f32 1.0, %v731
        %v733 = vrcp.pop %v577
        %v734 = vmul.f32 %v577, %v733
        %v735 = vsub.f32 1.0, %v734
        %v736 = vmul.f32 %v733, %v735
        %v737 = vadd.f32 %v733, %v736
        %vm738 = vweird.f32 %v577
        %vm739 = vweird.f32 %v733
        %vm740 = vmor %vm738, %vm739
        %v741 = vsel %vm740, %v733, %v737
        %v742 = vand.u32 2147483647, %v577
        %vm743 = vcmp.eq.f32.partialorder %v742, 8.507059e+37
        %v744 = vand.u32 %v577, 2147483648
        %v745 = vor.u32 1.1754944e-38, %v744
        %v746 = vsel %vm743, %v745, %v741
        %v747 = vmul.f32 1.0, %v746
        %v748 = vrcp.pop %v578
        %v749 = vmul.f32 %v578, %v748
        %v750 = vsub.f32 1.0, %v749
        %v751 = vmul.f32 %v748, %v750
        %v752 = vadd.f32 %v748, %v751
        %vm753 = vweird.f32 %v578
        %vm754 = vweird.f32 %v748
        %vm755 = vmor %vm753, %vm754
        %v756 = vsel %vm755, %v748, %v752
        %v757 = vand.u32 2147483647, %v578
        %vm758 = vcmp.eq.f32.partialorder %v757, 8.507059e+37
        %v759 = vand.u32 %v578, 2147483648
        %v760 = vor.u32 1.1754944e-38, %v759
        %v761 = vsel %vm758, %v760, %v756
        %v762 = vmul.f32 1.0, %v761
        %v763 = vrcp.pop %v579
        %v764 = vmul.f32 %v579, %v763
        %v765 = vsub.f32 1.0, %v764
        %v766 = vmul.f32 %v763, %v765
        %v767 = vadd.f32 %v763, %v766
        %vm768 = vweird.f32 %v579
        %vm769 = vweird.f32 %v763
        %vm770 = vmor %vm768, %vm769
        %v771 = vsel %vm770, %v763, %v767
        %v772 = vand.u32 2147483647, %v579
        %vm773 = vcmp.eq.f32.partialorder %v772, 8.507059e+37
        %v774 = vand.u32 %v579, 2147483648
        %v775 = vor.u32 1.1754944e-38, %v774
        %v776 = vsel %vm773, %v775, %v771
        %v777 = vmul.f32 1.0, %v776
        %v778 = vrcp.pop %v580
        %v779 = vmul.f32 %v580, %v778
        %v780 = vsub.f32 1.0, %v779
        %v781 = vmul.f32 %v778, %v780
        %v782 = vadd.f32 %v778, %v781
        %vm783 = vweird.f32 %v580
        %vm784 = vweird.f32 %v778
        %vm785 = vmor %vm783, %vm784
        %v786 = vsel %vm785, %v778, %v782
        %v787 = vand.u32 2147483647, %v580
        %vm788 = vcmp.eq.f32.partialorder %v787, 8.507059e+37
        %v789 = vand.u32 %v580, 2147483648
        %v790 = vor.u32 1.1754944e-38, %v789
        %v791 = vsel %vm788, %v790, %v786
        %v792 = vmul.f32 1.0, %v791
        %v793 = vrcp.pop %v581
        %v794 = vmul.f32 %v581, %v793
        %v795 = vsub.f32 1.0, %v794
        %v796 = vmul.f32 %v793, %v795
        %v797 = vadd.f32 %v793, %v796
        %vm798 = vweird.f32 %v581
        %vm799 = vweird.f32 %v793
        %vm800 = vmor %vm798, %vm799
        %v801 = vsel %vm800, %v793, %v797
        %v802 = vand.u32 2147483647, %v581
        %vm803 = vcmp.eq.f32.partialorder %v802, 8.507059e+37
        %v804 = vand.u32 %v581, 2147483648
        %v805 = vor.u32 1.1754944e-38, %v804
        %v806 = vsel %vm803, %v805, %v801
        %v807 = vmul.f32 1.0, %v806
        %v808 = vrcp.pop %v582
        %v809 = vmul.f32 %v582, %v808
        %v810 = vsub.f32 1.0, %v809
        %v811 = vmul.f32 %v808, %v810
        %v812 = vadd.f32 %v808, %v811
        %vm813 = vweird.f32 %v582
        %vm814 = vweird.f32 %v808
        %vm815 = vmor %vm813, %vm814
        %v816 = vsel %vm815, %v808, %v812
        %v817 = vand.u32 2147483647, %v582
        %vm818 = vcmp.eq.f32.partialorder %v817, 8.507059e+37
        %v819 = vand.u32 %v582, 2147483648
        %v820 = vor.u32 1.1754944e-38, %v819
        %v821 = vsel %vm818, %v820, %v816
        %v822 = vmul.f32 1.0, %v821
        %v823 = vmul.f32 %v480, %v597
        %v824 = vmul.f32 %v482, %v612
        %v825 = vmul.f32 %v485, %v627
        %v826 = vmul.f32 %v487, %v642
        %v827 = vmul.f32 %v490, %v657
        %v828 = vmul.f32 %v492, %v672
        %v829 = vmul.f32 %v495, %v687
        %v830 = vmul.f32 %v497, %v702
        %v831 = vmul.f32 %v500, %v717
        %v832 = vmul.f32 %v502, %v732
        %v833 = vmul.f32 %v505, %v747
        %v834 = vmul.f32 %v507, %v762
        %v835 = vmul.f32 %v510, %v777
        %v836 = vmul.f32 %v512, %v792
        %v837 = vmul.f32 %v515, %v807
        %v838 = vmul.f32 %v517, %v822
        %v839 = vxor.u32 %v823, 2147483648
        %v840 = vxor.u32 %v824, 2147483648
        %v841 = vxor.u32 %v825, 2147483648
        %v842 = vxor.u32 %v826, 2147483648
        %v843 = vxor.u32 %v827, 2147483648
        %v844 = vxor.u32 %v828, 2147483648
        %v845 = vxor.u32 %v829, 2147483648
        %v846 = vxor.u32 %v830, 2147483648
        %v847 = vxor.u32 %v831, 2147483648
        %v848 = vxor.u32 %v832, 2147483648
        %v849 = vxor.u32 %v833, 2147483648
        %v850 = vxor.u32 %v834, 2147483648
        %v851 = vxor.u32 %v835, 2147483648
        %v852 = vxor.u32 %v836, 2147483648
        %v853 = vxor.u32 %v837, 2147483648
        %v854 = vxor.u32 %v838, 2147483648
        %v855 = vmul.f32 %v839, 1.442695
        %v856 = vpow.pop %v855
        %v857 = vmul.f32 %v840, 1.442695
        %v858 = vpow.pop %v857
        %v859 = vmul.f32 %v841, 1.442695
        %v860 = vpow.pop %v859
        %v861 = vmul.f32 %v842, 1.442695
        %v862 = vpow.pop %v861
        %v863 = vmul.f32 %v843, 1.442695
        %v864 = vpow.pop %v863
        %v865 = vmul.f32 %v844, 1.442695
        %v866 = vpow.pop %v865
        %v867 = vmul.f32 %v845, 1.442695
        %v868 = vpow.pop %v867
        %v869 = vmul.f32 %v846, 1.442695
        %v870 = vpow.pop %v869
        %v871 = vmul.f32 %v847, 1.442695
        %v872 = vpow.pop %v871
        %v873 = vmul.f32 %v848, 1.442695
        %v874 = vpow.pop %v873
        %v875 = vmul.f32 %v849, 1.442695
        %v876 = vpow.pop %v875
        %v877 = vmul.f32 %v850, 1.442695
        %v878 = vpow.pop %v877
        %v879 = vmul.f32 %v851, 1.442695
        %v880 = vpow.pop %v879
        %v881 = vmul.f32 %v852, 1.442695
        %v882 = vpow.pop %v881
        %v883 = vmul.f32 %v853, 1.442695
        %v884 = vpow.pop %v883
        %v885 = vmul.f32 %v854, 1.442695
        %v886 = vpow.pop %v885
        %v887 = vadd.f32 %v856, 1.0
        %v888 = vadd.f32 %v858, 1.0
        %v889 = vadd.f32 %v860, 1.0
        %v890 = vadd.f32 %v862, 1.0
        %v891 = vadd.f32 %v864, 1.0
        %v892 = vadd.f32 %v866, 1.0
        %v893 = vadd.f32 %v868, 1.0
        %v894 = vadd.f32 %v870, 1.0
        %v895 = vadd.f32 %v872, 1.0
        %v896 = vadd.f32 %v874, 1.0
        %v897 = vadd.f32 %v876, 1.0
        %v898 = vadd.f32 %v878, 1.0
        %v899 = vadd.f32 %v880, 1.0
        %v900 = vadd.f32 %v882, 1.0
        %v901 = vadd.f32 %v884, 1.0
        %v902 = vadd.f32 %v886, 1.0
        %v903 = vrcp.pop %v887
        %v904 = vmul.f32 %v887, %v903
        %v905 = vsub.f32 1.0, %v904
        %v906 = vmul.f32 %v903, %v905
        %v907 = vadd.f32 %v903, %v906
        %vm908 = vweird.f32 %v887
        %vm909 = vweird.f32 %v903
        %vm910 = vmor %vm908, %vm909
        %v911 = vsel %vm910, %v903, %v907
        %v912 = vand.u32 2147483647, %v887
        %vm913 = vcmp.eq.f32.partialorder %v912, 8.507059e+37
        %v914 = vand.u32 %v887, 2147483648
        %v915 = vor.u32 1.1754944e-38, %v914
        %v916 = vsel %vm913, %v915, %v911
        %v917 = vmul.f32 1.0, %v916
        %v918 = vrcp.pop %v888
        %v919 = vmul.f32 %v888, %v918
        %v920 = vsub.f32 1.0, %v919
        %v921 = vmul.f32 %v918, %v920
        %v922 = vadd.f32 %v918, %v921
        %vm923 = vweird.f32 %v888
        %vm924 = vweird.f32 %v918
        %vm925 = vmor %vm923, %vm924
        %v926 = vsel %vm925, %v918, %v922
        %v927 = vand.u32 2147483647, %v888
        %vm928 = vcmp.eq.f32.partialorder %v927, 8.507059e+37
        %v929 = vand.u32 %v888, 2147483648
        %v930 = vor.u32 1.1754944e-38, %v929
        %v931 = vsel %vm928, %v930, %v926
        %v932 = vmul.f32 1.0, %v931
        %v933 = vrcp.pop %v889
        %v934 = vmul.f32 %v889, %v933
        %v935 = vsub.f32 1.0, %v934
        %v936 = vmul.f32 %v933, %v935
        %v937 = vadd.f32 %v933, %v936
        %vm938 = vweird.f32 %v889
        %vm939 = vweird.f32 %v933
        %vm940 = vmor %vm938, %vm939
        %v941 = vsel %vm940, %v933, %v937
        %v942 = vand.u32 2147483647, %v889
        %vm943 = vcmp.eq.f32.partialorder %v942, 8.507059e+37
        %v944 = vand.u32 %v889, 2147483648
        %v945 = vor.u32 1.1754944e-38, %v944
        %v946 = vsel %vm943, %v945, %v941
        %v947 = vmul.f32 1.0, %v946
        %v948 = vrcp.pop %v890
        %v949 = vmul.f32 %v890, %v948
        %v950 = vsub.f32 1.0, %v949
        %v951 = vmul.f32 %v948, %v950
        %v952 = vadd.f32 %v948, %v951
        %vm953 = vweird.f32 %v890
        %vm954 = vweird.f32 %v948
        %vm955 = vmor %vm953, %vm954
        %v956 = vsel %vm955, %v948, %v952
        %v957 = vand.u32 2147483647, %v890
        %vm958 = vcmp.eq.f32.partialorder %v957, 8.507059e+37
        %v959 = vand.u32 %v890, 2147483648
        %v960 = vor.u32 1.1754944e-38, %v959
        %v961 = vsel %vm958, %v960, %v956
        %v962 = vmul.f32 1.0, %v961
        %v963 = vrcp.pop %v891
        %v964 = vmul.f32 %v891, %v963
        %v965 = vsub.f32 1.0, %v964
        %v966 = vmul.f32 %v963, %v965
        %v967 = vadd.f32 %v963, %v966
        %vm968 = vweird.f32 %v891
        %vm969 = vweird.f32 %v963
        %vm970 = vmor %vm968, %vm969
        %v971 = vsel %vm970, %v963, %v967
        %v972 = vand.u32 2147483647, %v891
        %vm973 = vcmp.eq.f32.partialorder %v972, 8.507059e+37
        %v974 = vand.u32 %v891, 2147483648
        %v975 = vor.u32 1.1754944e-38, %v974
        %v976 = vsel %vm973, %v975, %v971
        %v977 = vmul.f32 1.0, %v976
        %v978 = vrcp.pop %v892
        %v979 = vmul.f32 %v892, %v978
        %v980 = vsub.f32 1.0, %v979
        %v981 = vmul.f32 %v978, %v980
        %v982 = vadd.f32 %v978, %v981
        %vm983 = vweird.f32 %v892
        %vm984 = vweird.f32 %v978
        %vm985 = vmor %vm983, %vm984
        %v986 = vsel %vm985, %v978, %v982
        %v987 = vand.u32 2147483647, %v892
        %vm988 = vcmp.eq.f32.partialorder %v987, 8.507059e+37
        %v989 = vand.u32 %v892, 2147483648
        %v990 = vor.u32 1.1754944e-38, %v989
        %v991 = vsel %vm988, %v990, %v986
        %v992 = vmul.f32 1.0, %v991
        %v993 = vrcp.pop %v893
        %v994 = vmul.f32 %v893, %v993
        %v995 = vsub.f32 1.0, %v994
        %v996 = vmul.f32 %v993, %v995
        %v997 = vadd.f32 %v993, %v996
        %vm998 = vweird.f32 %v893
        %vm999 = vweird.f32 %v993
        %vm1000 = vmor %vm998, %vm999
        %v1001 = vsel %vm1000, %v993, %v997
        %v1002 = vand.u32 2147483647, %v893
        %vm1003 = vcmp.eq.f32.partialorder %v1002, 8.507059e+37
        %v1004 = vand.u32 %v893, 2147483648
        %v1005 = vor.u32 1.1754944e-38, %v1004
        %v1006 = vsel %vm1003, %v1005, %v1001
        %v1007 = vmul.f32 1.0, %v1006
        %v1008 = vrcp.pop %v894
        %v1009 = vmul.f32 %v894, %v1008
        %v1010 = vsub.f32 1.0, %v1009
        %v1011 = vmul.f32 %v1008, %v1010
        %v1012 = vadd.f32 %v1008, %v1011
        %vm1013 = vweird.f32 %v894
        %vm1014 = vweird.f32 %v1008
        %vm1015 = vmor %vm1013, %vm1014
        %v1016 = vsel %vm1015, %v1008, %v1012
        %v1017 = vand.u32 2147483647, %v894
        %vm1018 = vcmp.eq.f32.partialorder %v1017, 8.507059e+37
        %v1019 = vand.u32 %v894, 2147483648
        %v1020 = vor.u32 1.1754944e-38, %v1019
        %v1021 = vsel %vm1018, %v1020, %v1016
        %v1022 = vmul.f32 1.0, %v1021
        %v1023 = vrcp.pop %v895
        %v1024 = vmul.f32 %v895, %v1023
        %v1025 = vsub.f32 1.0, %v1024
        %v1026 = vmul.f32 %v1023, %v1025
        %v1027 = vadd.f32 %v1023, %v1026
        %vm1028 = vweird.f32 %v895
        %vm1029 = vweird.f32 %v1023
        %vm1030 = vmor %vm1028, %vm1029
        %v1031 = vsel %vm1030, %v1023, %v1027
        %v1032 = vand.u32 2147483647, %v895
        %vm1033 = vcmp.eq.f32.partialorder %v1032, 8.507059e+37
        %v1034 = vand.u32 %v895, 2147483648
        %v1035 = vor.u32 1.1754944e-38, %v1034
        %v1036 = vsel %vm1033, %v1035, %v1031
        %v1037 = vmul.f32 1.0, %v1036
        %v1038 = vrcp.pop %v896
        %v1039 = vmul.f32 %v896, %v1038
        %v1040 = vsub.f32 1.0, %v1039
        %v1041 = vmul.f32 %v1038, %v1040
        %v1042 = vadd.f32 %v1038, %v1041
        %vm1043 = vweird.f32 %v896
        %vm1044 = vweird.f32 %v1038
        %vm1045 = vmor %vm1043, %vm1044
        %v1046 = vsel %vm1045, %v1038, %v1042
        %v1047 = vand.u32 2147483647, %v896
        %vm1048 = vcmp.eq.f32.partialorder %v1047, 8.507059e+37
        %v1049 = vand.u32 %v896, 2147483648
        %v1050 = vor.u32 1.1754944e-38, %v1049
        %v1051 = vsel %vm1048, %v1050, %v1046
        %v1052 = vmul.f32 1.0, %v1051
        %v1053 = vrcp.pop %v897
        %v1054 = vmul.f32 %v897, %v1053
        %v1055 = vsub.f32 1.0, %v1054
        %v1056 = vmul.f32 %v1053, %v1055
        %v1057 = vadd.f32 %v1053, %v1056
        %vm1058 = vweird.f32 %v897
        %vm1059 = vweird.f32 %v1053
        %vm1060 = vmor %vm1058, %vm1059
        %v1061 = vsel %vm1060, %v1053, %v1057
        %v1062 = vand.u32 2147483647, %v897
        %vm1063 = vcmp.eq.f32.partialorder %v1062, 8.507059e+37
        %v1064 = vand.u32 %v897, 2147483648
        %v1065 = vor.u32 1.1754944e-38, %v1064
        %v1066 = vsel %vm1063, %v1065, %v1061
        %v1067 = vmul.f32 1.0, %v1066
        %v1068 = vrcp.pop %v898
        %v1069 = vmul.f32 %v898, %v1068
        %v1070 = vsub.f32 1.0, %v1069
        %v1071 = vmul.f32 %v1068, %v1070
        %v1072 = vadd.f32 %v1068, %v1071
        %vm1073 = vweird.f32 %v898
        %vm1074 = vweird.f32 %v1068
        %vm1075 = vmor %vm1073, %vm1074
        %v1076 = vsel %vm1075, %v1068, %v1072
        %v1077 = vand.u32 2147483647, %v898
        %vm1078 = vcmp.eq.f32.partialorder %v1077, 8.507059e+37
        %v1079 = vand.u32 %v898, 2147483648
        %v1080 = vor.u32 1.1754944e-38, %v1079
        %v1081 = vsel %vm1078, %v1080, %v1076
        %v1082 = vmul.f32 1.0, %v1081
        %v1083 = vrcp.pop %v899
        %v1084 = vmul.f32 %v899, %v1083
        %v1085 = vsub.f32 1.0, %v1084
        %v1086 = vmul.f32 %v1083, %v1085
        %v1087 = vadd.f32 %v1083, %v1086
        %vm1088 = vweird.f32 %v899
        %vm1089 = vweird.f32 %v1083
        %vm1090 = vmor %vm1088, %vm1089
        %v1091 = vsel %vm1090, %v1083, %v1087
        %v1092 = vand.u32 2147483647, %v899
        %vm1093 = vcmp.eq.f32.partialorder %v1092, 8.507059e+37
        %v1094 = vand.u32 %v899, 2147483648
        %v1095 = vor.u32 1.1754944e-38, %v1094
        %v1096 = vsel %vm1093, %v1095, %v1091
        %v1097 = vmul.f32 1.0, %v1096
        %v1098 = vrcp.pop %v900
        %v1099 = vmul.f32 %v900, %v1098
        %v1100 = vsub.f32 1.0, %v1099
        %v1101 = vmul.f32 %v1098, %v1100
        %v1102 = vadd.f32 %v1098, %v1101
        %vm1103 = vweird.f32 %v900
        %vm1104 = vweird.f32 %v1098
        %vm1105 = vmor %vm1103, %vm1104
        %v1106 = vsel %vm1105, %v1098, %v1102
        %v1107 = vand.u32 2147483647, %v900
        %vm1108 = vcmp.eq.f32.partialorder %v1107, 8.507059e+37
        %v1109 = vand.u32 %v900, 2147483648
        %v1110 = vor.u32 1.1754944e-38, %v1109
        %v1111 = vsel %vm1108, %v1110, %v1106
        %v1112 = vmul.f32 1.0, %v1111
        %v1113 = vrcp.pop %v901
        %v1114 = vmul.f32 %v901, %v1113
        %v1115 = vsub.f32 1.0, %v1114
        %v1116 = vmul.f32 %v1113, %v1115
        %v1117 = vadd.f32 %v1113, %v1116
        %vm1118 = vweird.f32 %v901
        %vm1119 = vweird.f32 %v1113
        %vm1120 = vmor %vm1118, %vm1119
        %v1121 = vsel %vm1120, %v1113, %v1117
        %v1122 = vand.u32 2147483647, %v901
        %vm1123 = vcmp.eq.f32.partialorder %v1122, 8.507059e+37
        %v1124 = vand.u32 %v901, 2147483648
        %v1125 = vor.u32 1.1754944e-38, %v1124
        %v1126 = vsel %vm1123, %v1125, %v1121
        %v1127 = vmul.f32 1.0, %v1126
        %v1128 = vrcp.pop %v902
        %v1129 = vmul.f32 %v902, %v1128
        %v1130 = vsub.f32 1.0, %v1129
        %v1131 = vmul.f32 %v1128, %v1130
        %v1132 = vadd.f32 %v1128, %v1131
        %vm1133 = vweird.f32 %v902
        %vm1134 = vweird.f32 %v1128
        %vm1135 = vmor %vm1133, %vm1134
        %v1136 = vsel %vm1135, %v1128, %v1132
        %v1137 = vand.u32 2147483647, %v902
        %vm1138 = vcmp.eq.f32.partialorder %v1137, 8.507059e+37
        %v1139 = vand.u32 %v902, 2147483648
        %v1140 = vor.u32 1.1754944e-38, %v1139
        %v1141 = vsel %vm1138, %v1140, %v1136
        %v1142 = vmul.f32 1.0, %v1141
        %v1143 = vmul.f32 %v823, %v917
        %v1144 = vmul.f32 %v824, %v932
        %v1145 = vmul.f32 %v825, %v947
        %v1146 = vmul.f32 %v826, %v962
        %v1147 = vmul.f32 %v827, %v977
        %v1148 = vmul.f32 %v828, %v992
        %v1149 = vmul.f32 %v829, %v1007
        %v1150 = vmul.f32 %v830, %v1022
        %v1151 = vmul.f32 %v831, %v1037
        %v1152 = vmul.f32 %v832, %v1052
        %v1153 = vmul.f32 %v833, %v1067
        %v1154 = vmul.f32 %v834, %v1082
        %v1155 = vmul.f32 %v835, %v1097
        %v1156 = vmul.f32 %v836, %v1112
        %v1157 = vmul.f32 %v837, %v1127
        %v1158 = vmul.f32 %v838, %v1142
        %1159 = vadd.xlane.f32.xlu0 %v1143
        %v1160 = vpop.xlane.xlu0 %1159
        %1161 = vadd.xlane.f32.xlu0 %v1144
        %v1162 = vpop.xlane.xlu0 %1161
        %1163 = vadd.xlane.f32.xlu0 %v1145
        %v1164 = vpop.xlane.xlu0 %1163
        %1165 = vadd.xlane.f32.xlu0 %v1146
        %v1166 = vpop.xlane.xlu0 %1165
        %1167 = vadd.xlane.f32.xlu0 %v1147
        %v1168 = vpop.xlane.xlu0 %1167
        %1169 = vadd.xlane.f32.xlu0 %v1148
        %v1170 = vpop.xlane.xlu0 %1169
        %1171 = vadd.xlane.f32.xlu0 %v1149
        %v1172 = vpop.xlane.xlu0 %1171
        %1173 = vadd.xlane.f32.xlu0 %v1150
        %v1174 = vpop.xlane.xlu0 %1173
        %1175 = vadd.xlane.f32.xlu0 %v1151
        %v1176 = vpop.xlane.xlu0 %1175
        %1177 = vadd.xlane.f32.xlu0 %v1152
        %v1178 = vpop.xlane.xlu0 %1177
        %1179 = vadd.xlane.f32.xlu0 %v1153
        %v1180 = vpop.xlane.xlu0 %1179
        %1181 = vadd.xlane.f32.xlu0 %v1154
        %v1182 = vpop.xlane.xlu0 %1181
        %1183 = vadd.xlane.f32.xlu0 %v1155
        %v1184 = vpop.xlane.xlu0 %1183
        %1185 = vadd.xlane.f32.xlu0 %v1156
        %v1186 = vpop.xlane.xlu0 %1185
        %1187 = vadd.xlane.f32.xlu0 %v1157
        %v1188 = vpop.xlane.xlu0 %1187
        %1189 = vadd.xlane.f32.xlu0 %v1158
        %v1190 = vpop.xlane.xlu0 %1189
        %v1191 = vmul.f32 %v1143, %v1143
        %v1192 = vmul.f32 %v1144, %v1144
        %v1193 = vmul.f32 %v1145, %v1145
        %v1194 = vmul.f32 %v1146, %v1146
        %v1195 = vmul.f32 %v1147, %v1147
        %v1196 = vmul.f32 %v1148, %v1148
        %v1197 = vmul.f32 %v1149, %v1149
        %v1198 = vmul.f32 %v1150, %v1150
        %v1199 = vmul.f32 %v1151, %v1151
        %v1200 = vmul.f32 %v1152, %v1152
        %v1201 = vmul.f32 %v1153, %v1153
        %v1202 = vmul.f32 %v1154, %v1154
        %v1203 = vmul.f32 %v1155, %v1155
        %v1204 = vmul.f32 %v1156, %v1156
        %v1205 = vmul.f32 %v1157, %v1157
        %v1206 = vmul.f32 %v1158, %v1158
        %1207 = vadd.xlane.f32.xlu0 %v1191
        %v1208 = vpop.xlane.xlu0 %1207
        %1209 = vadd.xlane.f32.xlu0 %v1192
        %v1210 = vpop.xlane.xlu0 %1209
        %1211 = vadd.xlane.f32.xlu0 %v1193
        %v1212 = vpop.xlane.xlu0 %1211
        %1213 = vadd.xlane.f32.xlu0 %v1194
        %v1214 = vpop.xlane.xlu0 %1213
        %1215 = vadd.xlane.f32.xlu0 %v1195
        %v1216 = vpop.xlane.xlu0 %1215
        %1217 = vadd.xlane.f32.xlu0 %v1196
        %v1218 = vpop.xlane.xlu0 %1217
        %1219 = vadd.xlane.f32.xlu0 %v1197
        %v1220 = vpop.xlane.xlu0 %1219
        %1221 = vadd.xlane.f32.xlu0 %v1198
        %v1222 = vpop.xlane.xlu0 %1221
        %1223 = vadd.xlane.f32.xlu0 %v1199
        %v1224 = vpop.xlane.xlu0 %1223
        %1225 = vadd.xlane.f32.xlu0 %v1200
        %v1226 = vpop.xlane.xlu0 %1225
        %1227 = vadd.xlane.f32.xlu0 %v1201
        %v1228 = vpop.xlane.xlu0 %1227
        %1229 = vadd.xlane.f32.xlu0 %v1202
        %v1230 = vpop.xlane.xlu0 %1229
        %1231 = vadd.xlane.f32.xlu0 %v1203
        %v1232 = vpop.xlane.xlu0 %1231
        %1233 = vadd.xlane.f32.xlu0 %v1204
        %v1234 = vpop.xlane.xlu0 %1233
        %1235 = vadd.xlane.f32.xlu0 %v1205
        %v1236 = vpop.xlane.xlu0 %1235
        %1237 = vadd.xlane.f32.xlu0 %v1206
        %v1238 = vpop.xlane.xlu0 %1237
        %v1239 = vmul.f32 %v1160, 0.015625
        %v1240 = vmul.f32 %v1162, 0.015625
        %v1241 = vmul.f32 %v1164, 0.015625
        %v1242 = vmul.f32 %v1166, 0.015625
        %v1243 = vmul.f32 %v1168, 0.015625
        %v1244 = vmul.f32 %v1170, 0.015625
        %v1245 = vmul.f32 %v1172, 0.015625
        %v1246 = vmul.f32 %v1174, 0.015625
        %v1247 = vmul.f32 %v1176, 0.015625
        %v1248 = vmul.f32 %v1178, 0.015625
        %v1249 = vmul.f32 %v1180, 0.015625
        %v1250 = vmul.f32 %v1182, 0.015625
        %v1251 = vmul.f32 %v1184, 0.015625
        %v1252 = vmul.f32 %v1186, 0.015625
        %v1253 = vmul.f32 %v1188, 0.015625
        %v1254 = vmul.f32 %v1190, 0.015625
        %v1255 = vmul.f32 %v1208, 0.015625
        %v1256 = vmul.f32 %v1210, 0.015625
        %v1257 = vmul.f32 %v1212, 0.015625
        %v1258 = vmul.f32 %v1214, 0.015625
        %v1259 = vmul.f32 %v1216, 0.015625
        %v1260 = vmul.f32 %v1218, 0.015625
        %v1261 = vmul.f32 %v1220, 0.015625
        %v1262 = vmul.f32 %v1222, 0.015625
        %v1263 = vmul.f32 %v1224, 0.015625
        %v1264 = vmul.f32 %v1226, 0.015625
        %v1265 = vmul.f32 %v1228, 0.015625
        %v1266 = vmul.f32 %v1230, 0.015625
        %v1267 = vmul.f32 %v1232, 0.015625
        %v1268 = vmul.f32 %v1234, 0.015625
        %v1269 = vmul.f32 %v1236, 0.015625
        %v1270 = vmul.f32 %v1238, 0.015625
        %v1271 = vmul.f32 %v1239, %v1239
        %v1272 = vmul.f32 %v1240, %v1240
        %v1273 = vmul.f32 %v1241, %v1241
        %v1274 = vmul.f32 %v1242, %v1242
        %v1275 = vmul.f32 %v1243, %v1243
        %v1276 = vmul.f32 %v1244, %v1244
        %v1277 = vmul.f32 %v1245, %v1245
        %v1278 = vmul.f32 %v1246, %v1246
        %v1279 = vmul.f32 %v1247, %v1247
        %v1280 = vmul.f32 %v1248, %v1248
        %v1281 = vmul.f32 %v1249, %v1249
        %v1282 = vmul.f32 %v1250, %v1250
        %v1283 = vmul.f32 %v1251, %v1251
        %v1284 = vmul.f32 %v1252, %v1252
        %v1285 = vmul.f32 %v1253, %v1253
        %v1286 = vmul.f32 %v1254, %v1254
        %v1287 = vsub.f32 %v1255, %v1271
        %v1288 = vsub.f32 %v1256, %v1272
        %v1289 = vsub.f32 %v1257, %v1273
        %v1290 = vsub.f32 %v1258, %v1274
        %v1291 = vsub.f32 %v1259, %v1275
        %v1292 = vsub.f32 %v1260, %v1276
        %v1293 = vsub.f32 %v1261, %v1277
        %v1294 = vsub.f32 %v1262, %v1278
        %v1295 = vsub.f32 %v1263, %v1279
        %v1296 = vsub.f32 %v1264, %v1280
        %v1297 = vsub.f32 %v1265, %v1281
        %v1298 = vsub.f32 %v1266, %v1282
        %v1299 = vsub.f32 %v1267, %v1283
        %v1300 = vsub.f32 %v1268, %v1284
        %v1301 = vsub.f32 %v1269, %v1285
        %v1302 = vsub.f32 %v1270, %v1286
        %v1303 = vsub.f32 %v1143, %v1239
        %v1304 = vsub.f32 %v1144, %v1240
        %v1305 = vsub.f32 %v1145, %v1241
        %v1306 = vsub.f32 %v1146, %v1242
        %v1307 = vsub.f32 %v1147, %v1243
        %v1308 = vsub.f32 %v1148, %v1244
        %v1309 = vsub.f32 %v1149, %v1245
        %v1310 = vsub.f32 %v1150, %v1246
        %v1311 = vsub.f32 %v1151, %v1247
        %v1312 = vsub.f32 %v1152, %v1248
        %v1313 = vsub.f32 %v1153, %v1249
        %v1314 = vsub.f32 %v1154, %v1250
        %v1315 = vsub.f32 %v1155, %v1251
        %v1316 = vsub.f32 %v1156, %v1252
        %v1317 = vsub.f32 %v1157, %v1253
        %v1318 = vsub.f32 %v1158, %v1254
        %v1319 = vadd.f32 %v1287, 1e-05
        %v1320 = vadd.f32 %v1288, 1e-05
        %v1321 = vadd.f32 %v1289, 1e-05
        %v1322 = vadd.f32 %v1290, 1e-05
        %v1323 = vadd.f32 %v1291, 1e-05
        %v1324 = vadd.f32 %v1292, 1e-05
        %v1325 = vadd.f32 %v1293, 1e-05
        %v1326 = vadd.f32 %v1294, 1e-05
        %v1327 = vadd.f32 %v1295, 1e-05
        %v1328 = vadd.f32 %v1296, 1e-05
        %v1329 = vadd.f32 %v1297, 1e-05
        %v1330 = vadd.f32 %v1298, 1e-05
        %v1331 = vadd.f32 %v1299, 1e-05
        %v1332 = vadd.f32 %v1300, 1e-05
        %v1333 = vadd.f32 %v1301, 1e-05
        %v1334 = vadd.f32 %v1302, 1e-05
        %v1335 = vrsqrt.pop %v1319
        %v1336 = vmul.f32 %v1335, %v1319
        %v1337 = vmul.f32 %v1336, %v1335
        %v1338 = vmul.f32 0.5, %v1337
        %v1339 = vsub.f32 1.5, %v1338
        %v1340 = vmul.f32 %v1335, %v1339
        %vm1341 = vweird.f32 %v1319
        %vm1342 = vweird.f32 %v1335
        %vm1343 = vmor %vm1341, %vm1342
        %v1344 = vsel %vm1343, %v1335, %v1340
        %v1345 = vrsqrt.pop %v1320
        %v1346 = vmul.f32 %v1345, %v1320
        %v1347 = vmul.f32 %v1346, %v1345
        %v1348 = vmul.f32 0.5, %v1347
        %v1349 = vsub.f32 1.5, %v1348
        %v1350 = vmul.f32 %v1345, %v1349
        %vm1351 = vweird.f32 %v1320
        %vm1352 = vweird.f32 %v1345
        %vm1353 = vmor %vm1351, %vm1352
        %v1354 = vsel %vm1353, %v1345, %v1350
        %v1355 = vrsqrt.pop %v1321
        %v1356 = vmul.f32 %v1355, %v1321
        %v1357 = vmul.f32 %v1356, %v1355
        %v1358 = vmul.f32 0.5, %v1357
        %v1359 = vsub.f32 1.5, %v1358
        %v1360 = vmul.f32 %v1355, %v1359
        %vm1361 = vweird.f32 %v1321
        %vm1362 = vweird.f32 %v1355
        %vm1363 = vmor %vm1361, %vm1362
        %v1364 = vsel %vm1363, %v1355, %v1360
        %v1365 = vrsqrt.pop %v1322
        %v1366 = vmul.f32 %v1365, %v1322
        %v1367 = vmul.f32 %v1366, %v1365
        %v1368 = vmul.f32 0.5, %v1367
        %v1369 = vsub.f32 1.5, %v1368
        %v1370 = vmul.f32 %v1365, %v1369
        %vm1371 = vweird.f32 %v1322
        %vm1372 = vweird.f32 %v1365
        %vm1373 = vmor %vm1371, %vm1372
        %v1374 = vsel %vm1373, %v1365, %v1370
        %v1375 = vrsqrt.pop %v1323
        %v1376 = vmul.f32 %v1375, %v1323
        %v1377 = vmul.f32 %v1376, %v1375
        %v1378 = vmul.f32 0.5, %v1377
        %v1379 = vsub.f32 1.5, %v1378
        %v1380 = vmul.f32 %v1375, %v1379
        %vm1381 = vweird.f32 %v1323
        %vm1382 = vweird.f32 %v1375
        %vm1383 = vmor %vm1381, %vm1382
        %v1384 = vsel %vm1383, %v1375, %v1380
        %v1385 = vrsqrt.pop %v1324
        %v1386 = vmul.f32 %v1385, %v1324
        %v1387 = vmul.f32 %v1386, %v1385
        %v1388 = vmul.f32 0.5, %v1387
        %v1389 = vsub.f32 1.5, %v1388
        %v1390 = vmul.f32 %v1385, %v1389
        %vm1391 = vweird.f32 %v1324
        %vm1392 = vweird.f32 %v1385
        %vm1393 = vmor %vm1391, %vm1392
        %v1394 = vsel %vm1393, %v1385, %v1390
        %v1395 = vrsqrt.pop %v1325
        %v1396 = vmul.f32 %v1395, %v1325
        %v1397 = vmul.f32 %v1396, %v1395
        %v1398 = vmul.f32 0.5, %v1397
        %v1399 = vsub.f32 1.5, %v1398
        %v1400 = vmul.f32 %v1395, %v1399
        %vm1401 = vweird.f32 %v1325
        %vm1402 = vweird.f32 %v1395
        %vm1403 = vmor %vm1401, %vm1402
        %v1404 = vsel %vm1403, %v1395, %v1400
        %v1405 = vrsqrt.pop %v1326
        %v1406 = vmul.f32 %v1405, %v1326
        %v1407 = vmul.f32 %v1406, %v1405
        %v1408 = vmul.f32 0.5, %v1407
        %v1409 = vsub.f32 1.5, %v1408
        %v1410 = vmul.f32 %v1405, %v1409
        %vm1411 = vweird.f32 %v1326
        %vm1412 = vweird.f32 %v1405
        %vm1413 = vmor %vm1411, %vm1412
        %v1414 = vsel %vm1413, %v1405, %v1410
        %v1415 = vrsqrt.pop %v1327
        %v1416 = vmul.f32 %v1415, %v1327
        %v1417 = vmul.f32 %v1416, %v1415
        %v1418 = vmul.f32 0.5, %v1417
        %v1419 = vsub.f32 1.5, %v1418
        %v1420 = vmul.f32 %v1415, %v1419
        %vm1421 = vweird.f32 %v1327
        %vm1422 = vweird.f32 %v1415
        %vm1423 = vmor %vm1421, %vm1422
        %v1424 = vsel %vm1423, %v1415, %v1420
        %v1425 = vrsqrt.pop %v1328
        %v1426 = vmul.f32 %v1425, %v1328
        %v1427 = vmul.f32 %v1426, %v1425
        %v1428 = vmul.f32 0.5, %v1427
        %v1429 = vsub.f32 1.5, %v1428
        %v1430 = vmul.f32 %v1425, %v1429
        %vm1431 = vweird.f32 %v1328
        %vm1432 = vweird.f32 %v1425
        %vm1433 = vmor %vm1431, %vm1432
        %v1434 = vsel %vm1433, %v1425, %v1430
        %v1435 = vrsqrt.pop %v1329
        %v1436 = vmul.f32 %v1435, %v1329
        %v1437 = vmul.f32 %v1436, %v1435
        %v1438 = vmul.f32 0.5, %v1437
        %v1439 = vsub.f32 1.5, %v1438
        %v1440 = vmul.f32 %v1435, %v1439
        %vm1441 = vweird.f32 %v1329
        %vm1442 = vweird.f32 %v1435
        %vm1443 = vmor %vm1441, %vm1442
        %v1444 = vsel %vm1443, %v1435, %v1440
        %v1445 = vrsqrt.pop %v1330
        %v1446 = vmul.f32 %v1445, %v1330
        %v1447 = vmul.f32 %v1446, %v1445
        %v1448 = vmul.f32 0.5, %v1447
        %v1449 = vsub.f32 1.5, %v1448
        %v1450 = vmul.f32 %v1445, %v1449
        %vm1451 = vweird.f32 %v1330
        %vm1452 = vweird.f32 %v1445
        %vm1453 = vmor %vm1451, %vm1452
        %v1454 = vsel %vm1453, %v1445, %v1450
        %v1455 = vrsqrt.pop %v1331
        %v1456 = vmul.f32 %v1455, %v1331
        %v1457 = vmul.f32 %v1456, %v1455
        %v1458 = vmul.f32 0.5, %v1457
        %v1459 = vsub.f32 1.5, %v1458
        %v1460 = vmul.f32 %v1455, %v1459
        %vm1461 = vweird.f32 %v1331
        %vm1462 = vweird.f32 %v1455
        %vm1463 = vmor %vm1461, %vm1462
        %v1464 = vsel %vm1463, %v1455, %v1460
        %v1465 = vrsqrt.pop %v1332
        %v1466 = vmul.f32 %v1465, %v1332
        %v1467 = vmul.f32 %v1466, %v1465
        %v1468 = vmul.f32 0.5, %v1467
        %v1469 = vsub.f32 1.5, %v1468
        %v1470 = vmul.f32 %v1465, %v1469
        %vm1471 = vweird.f32 %v1332
        %vm1472 = vweird.f32 %v1465
        %vm1473 = vmor %vm1471, %vm1472
        %v1474 = vsel %vm1473, %v1465, %v1470
        %v1475 = vrsqrt.pop %v1333
        %v1476 = vmul.f32 %v1475, %v1333
        %v1477 = vmul.f32 %v1476, %v1475
        %v1478 = vmul.f32 0.5, %v1477
        %v1479 = vsub.f32 1.5, %v1478
        %v1480 = vmul.f32 %v1475, %v1479
        %vm1481 = vweird.f32 %v1333
        %vm1482 = vweird.f32 %v1475
        %vm1483 = vmor %vm1481, %vm1482
        %v1484 = vsel %vm1483, %v1475, %v1480
        %v1485 = vrsqrt.pop %v1334
        %v1486 = vmul.f32 %v1485, %v1334
        %v1487 = vmul.f32 %v1486, %v1485
        %v1488 = vmul.f32 0.5, %v1487
        %v1489 = vsub.f32 1.5, %v1488
        %v1490 = vmul.f32 %v1485, %v1489
        %vm1491 = vweird.f32 %v1334
        %vm1492 = vweird.f32 %v1485
        %vm1493 = vmor %vm1491, %vm1492
        %v1494 = vsel %vm1493, %v1485, %v1490
        %v1495 = vmul.f32 %v1303, %v1344
        %v1496 = vmul.f32 %v1304, %v1354
        %v1497 = vmul.f32 %v1305, %v1364
        %v1498 = vmul.f32 %v1306, %v1374
        %v1499 = vmul.f32 %v1307, %v1384
        %v1500 = vmul.f32 %v1308, %v1394
        %v1501 = vmul.f32 %v1309, %v1404
        %v1502 = vmul.f32 %v1310, %v1414
        %v1503 = vmul.f32 %v1311, %v1424
        %v1504 = vmul.f32 %v1312, %v1434
        %v1505 = vmul.f32 %v1313, %v1444
        %v1506 = vmul.f32 %v1314, %v1454
        %v1507 = vmul.f32 %v1315, %v1464
        %v1508 = vmul.f32 %v1316, %v1474
        %v1509 = vmul.f32 %v1317, %v1484
        %v1510 = vmul.f32 %v1318, %v1494
        %v1511 = vperm.slane %v412, 1
        %v1512 = vmul.f32 %v1495, %v1511
        %v1513 = vmul.f32 %v1496, %v1511
        %v1514 = vmul.f32 %v1497, %v1511
        %v1515 = vmul.f32 %v1498, %v1511
        %v1516 = vmul.f32 %v1499, %v1511
        %v1517 = vmul.f32 %v1500, %v1511
        %v1518 = vmul.f32 %v1501, %v1511
        %v1519 = vmul.f32 %v1502, %v1511
        %v1520 = vmul.f32 %v1503, %v1511
        %v1521 = vmul.f32 %v1504, %v1511
        %v1522 = vmul.f32 %v1505, %v1511
        %v1523 = vmul.f32 %v1506, %v1511
        %v1524 = vmul.f32 %v1507, %v1511
        %v1525 = vmul.f32 %v1508, %v1511
        %v1526 = vmul.f32 %v1509, %v1511
        %v1527 = vmul.f32 %v1510, %v1511
        %v1528 = vperm.slane %v412, 2
        %v1529 = vadd.f32 %v1512, %v1528
        %v1530 = vadd.f32 %v1513, %v1528
        %v1531 = vadd.f32 %v1514, %v1528
        %v1532 = vadd.f32 %v1515, %v1528
        %v1533 = vadd.f32 %v1516, %v1528
        %v1534 = vadd.f32 %v1517, %v1528
        %v1535 = vadd.f32 %v1518, %v1528
        %v1536 = vadd.f32 %v1519, %v1528
        %v1537 = vadd.f32 %v1520, %v1528
        %v1538 = vadd.f32 %v1521, %v1528
        %v1539 = vadd.f32 %v1522, %v1528
        %v1540 = vadd.f32 %v1523, %v1528
        %v1541 = vadd.f32 %v1524, %v1528
        %v1542 = vadd.f32 %v1525, %v1528
        %v1543 = vadd.f32 %v1526, %v1528
        %v1544 = vadd.f32 %v1527, %v1528
        %v1545 = vld [vmem:[#allocation8] sm:$0xf]
        %v1546 = vld [vmem:[#allocation8 + $0x4] sm:$0xf]
        %v1547 = vld [vmem:[#allocation8 + $0x8] sm:$0xf]
        %v1548 = vld [vmem:[#allocation8 + $0xc] sm:$0xf]
        %v1549 = vld [vmem:[#allocation8 + $0x10] sm:$0xf]
        %v1550 = vld [vmem:[#allocation8 + $0x14] sm:$0xf]
        %v1551 = vld [vmem:[#allocation8 + $0x18] sm:$0xf]
        %v1552 = vld [vmem:[#allocation8 + $0x1c] sm:$0xf]
        %v1553 = vld [vmem:[#allocation8 + $0x20] sm:$0xf]
        %v1554 = vld [vmem:[#allocation8 + $0x24] sm:$0xf]
        %v1555 = vld [vmem:[#allocation8 + $0x28] sm:$0xf]
        %v1556 = vld [vmem:[#allocation8 + $0x2c] sm:$0xf]
        %v1557 = vld [vmem:[#allocation8 + $0x30] sm:$0xf]
        %v1558 = vld [vmem:[#allocation8 + $0x34] sm:$0xf]
        %v1559 = vld [vmem:[#allocation8 + $0x38] sm:$0xf]
        %v1560 = vld [vmem:[#allocation8 + $0x3c] sm:$0xf]
        %v1561 = vld [vmem:[#allocation10] sm:$0x7]
        %v1562 = vpack.c.bf16 %v1530, %v1529
        %v1563 = vpack.c.bf16 %v1532, %v1531
        %v1564 = vpack.c.bf16 %v1534, %v1533
        %v1565 = vpack.c.bf16 %v1536, %v1535
        %v1566 = vpack.c.bf16 %v1538, %v1537
        %v1567 = vpack.c.bf16 %v1540, %v1539
        %v1568 = vpack.c.bf16 %v1542, %v1541
        %v1569 = vpack.c.bf16 %v1544, %v1543
        %v1570 = vperm.slane %v1561, 0
        %v1587 = vunpack.c.l.b16 %v1545
        %v1588 = vunpack.c.l.b16 %v1546
        %v1589 = vunpack.c.l.b16 %v1547
        %v1590 = vunpack.c.l.b16 %v1548
        %v1591 = vunpack.c.l.b16 %v1549
        %v1592 = vunpack.c.l.b16 %v1550
        %v1593 = vunpack.c.l.b16 %v1551
        %v1594 = vunpack.c.l.b16 %v1552
        %v1595 = vunpack.c.l.b16 %v1553
        %v1596 = vunpack.c.l.b16 %v1554
        %v1597 = vunpack.c.l.b16 %v1555
        %v1598 = vunpack.c.l.b16 %v1556
        %v1599 = vunpack.c.l.b16 %v1557
        %v1600 = vunpack.c.l.b16 %v1558
        %v1601 = vunpack.c.l.b16 %v1559
        %v1602 = vunpack.c.l.b16 %v1560
        %v1603 = vpack.c.b16 %v1588, %v1587
        %v1604 = vpack.c.b16 %v1590, %v1589
        %v1605 = vpack.c.b16 %v1592, %v1591
        %v1606 = vpack.c.b16 %v1594, %v1593
        %v1607 = vpack.c.b16 %v1596, %v1595
        %v1608 = vpack.c.b16 %v1598, %v1597
        %v1609 = vpack.c.b16 %v1600, %v1599
        %v1610 = vpack.c.b16 %v1602, %v1601
        %1619 = vmatpush.bf16.msra.mxu0 %v1610
        %1620 = vmatpush.bf16.msra.mxu0 %v1609
        %1621 = vmatpush.bf16.msra.mxu0 %v1608
        %1622 = vmatpush.bf16.msra.mxu0 %v1607
        %1623 = vmatpush.bf16.msra.mxu0 %v1606
        %1624 = vmatpush.bf16.msra.mxu0 %v1605
        %1625 = vmatpush.bf16.msra.mxu0 %v1604
        %1626 = vmatpush.bf16.msra.mxu0 %v1603
        %1627 = vmatmul.bf16.gmra.mxu0 %v1562
        %v1628 = vpop.f32.mrf.mxu0
        %v1629 = vadd.f32 %v1570, %v1628
        %v1630 = vpop.f32.mrf.mxu0
        %v1631 = vadd.f32 %v1570, %v1630
        %1632 = vmatmul.bf16.gmra.mxu0 %v1563
        %v1633 = vpop.f32.mrf.mxu0
        %v1634 = vadd.f32 %v1570, %v1633
        %v1635 = vpop.f32.mrf.mxu0
        %v1636 = vadd.f32 %v1570, %v1635
        %1637 = vmatmul.bf16.gmra.mxu0 %v1564
        %v1638 = vpop.f32.mrf.mxu0
        %v1639 = vadd.f32 %v1570, %v1638
        %v1640 = vpop.f32.mrf.mxu0
        %v1641 = vadd.f32 %v1570, %v1640
        %1642 = vmatmul.bf16.gmra.mxu0 %v1565
        %v1643 = vpop.f32.mrf.mxu0
        %v1644 = vadd.f32 %v1570, %v1643
        %v1645 = vpop.f32.mrf.mxu0
        %v1646 = vadd.f32 %v1570, %v1645
        %1647 = vmatmul.bf16.gmra.mxu0 %v1566
        %v1648 = vpop.f32.mrf.mxu0
        %v1649 = vadd.f32 %v1570, %v1648
        %v1650 = vpop.f32.mrf.mxu0
        %v1651 = vadd.f32 %v1570, %v1650
        %1652 = vmatmul.bf16.gmra.mxu0 %v1567
        %v1653 = vpop.f32.mrf.mxu0
        %v1654 = vadd.f32 %v1570, %v1653
        %v1655 = vpop.f32.mrf.mxu0
        %v1656 = vadd.f32 %v1570, %v1655
        %1657 = vmatmul.bf16.gmra.mxu0 %v1568
        %v1658 = vpop.f32.mrf.mxu0
        %v1659 = vadd.f32 %v1570, %v1658
        %v1660 = vpop.f32.mrf.mxu0
        %v1661 = vadd.f32 %v1570, %v1660
        %1662 = vmatmul.bf16.gmra.mxu0 %v1569
        %v1663 = vpop.f32.mrf.mxu0
        %v1664 = vadd.f32 %v1570, %v1663
        %v1665 = vpop.f32.mrf.mxu0
        %v1666 = vadd.f32 %v1570, %v1665
        %1667 = vdwg.mxu0
        %v1668 = vxor.u32 %v1629, 2147483648
        %v1669 = vxor.u32 %v1631, 2147483648
        %v1670 = vxor.u32 %v1634, 2147483648
        %v1671 = vxor.u32 %v1636, 2147483648
        %v1672 = vxor.u32 %v1639, 2147483648
        %v1673 = vxor.u32 %v1641, 2147483648
        %v1674 = vxor.u32 %v1644, 2147483648
        %v1675 = vxor.u32 %v1646, 2147483648
        %v1676 = vxor.u32 %v1649, 2147483648
        %v1677 = vxor.u32 %v1651, 2147483648
        %v1678 = vxor.u32 %v1654, 2147483648
        %v1679 = vxor.u32 %v1656, 2147483648
        %v1680 = vxor.u32 %v1659, 2147483648
        %v1681 = vxor.u32 %v1661, 2147483648
        %v1682 = vxor.u32 %v1664, 2147483648
        %v1683 = vxor.u32 %v1666, 2147483648
        %v1684 = vmul.f32 %v1668, 1.442695
        %v1685 = vpow.pop %v1684
        %v1686 = vmul.f32 %v1669, 1.442695
        %v1687 = vpow.pop %v1686
        %v1688 = vmul.f32 %v1670, 1.442695
        %v1689 = vpow.pop %v1688
        %v1690 = vmul.f32 %v1671, 1.442695
        %v1691 = vpow.pop %v1690
        %v1692 = vmul.f32 %v1672, 1.442695
        %v1693 = vpow.pop %v1692
        %v1694 = vmul.f32 %v1673, 1.442695
        %v1695 = vpow.pop %v1694
        %v1696 = vmul.f32 %v1674, 1.442695
        %v1697 = vpow.pop %v1696
        %v1698 = vmul.f32 %v1675, 1.442695
        %v1699 = vpow.pop %v1698
        %v1700 = vmul.f32 %v1676, 1.442695
        %v1701 = vpow.pop %v1700
        %v1702 = vmul.f32 %v1677, 1.442695
        %v1703 = vpow.pop %v1702
        %v1704 = vmul.f32 %v1678, 1.442695
        %v1705 = vpow.pop %v1704
        %v1706 = vmul.f32 %v1679, 1.442695
        %v1707 = vpow.pop %v1706
        %v1708 = vmul.f32 %v1680, 1.442695
        %v1709 = vpow.pop %v1708
        %v1710 = vmul.f32 %v1681, 1.442695
        %v1711 = vpow.pop %v1710
        %v1712 = vmul.f32 %v1682, 1.442695
        %v1713 = vpow.pop %v1712
        %v1714 = vmul.f32 %v1683, 1.442695
        %v1715 = vpow.pop %v1714
        %v1716 = vadd.f32 %v1685, 1.0
        %v1717 = vadd.f32 %v1687, 1.0
        %v1718 = vadd.f32 %v1689, 1.0
        %v1719 = vadd.f32 %v1691, 1.0
        %v1720 = vadd.f32 %v1693, 1.0
        %v1721 = vadd.f32 %v1695, 1.0
        %v1722 = vadd.f32 %v1697, 1.0
        %v1723 = vadd.f32 %v1699, 1.0
        %v1724 = vadd.f32 %v1701, 1.0
        %v1725 = vadd.f32 %v1703, 1.0
        %v1726 = vadd.f32 %v1705, 1.0
        %v1727 = vadd.f32 %v1707, 1.0
        %v1728 = vadd.f32 %v1709, 1.0
        %v1729 = vadd.f32 %v1711, 1.0
        %v1730 = vadd.f32 %v1713, 1.0
        %v1731 = vadd.f32 %v1715, 1.0
        %v1732 = vrcp.pop %v1716
        %v1733 = vmul.f32 %v1716, %v1732
        %v1734 = vsub.f32 1.0, %v1733
        %v1735 = vmul.f32 %v1732, %v1734
        %v1736 = vadd.f32 %v1732, %v1735
        %vm1737 = vweird.f32 %v1716
        %vm1738 = vweird.f32 %v1732
        %vm1739 = vmor %vm1737, %vm1738
        %v1740 = vsel %vm1739, %v1732, %v1736
        %v1741 = vand.u32 2147483647, %v1716
        %vm1742 = vcmp.eq.f32.partialorder %v1741, 8.507059e+37
        %v1743 = vand.u32 %v1716, 2147483648
        %v1744 = vor.u32 1.1754944e-38, %v1743
        %v1745 = vsel %vm1742, %v1744, %v1740
        %v1746 = vmul.f32 1.0, %v1745
        %v1747 = vrcp.pop %v1717
        %v1748 = vmul.f32 %v1717, %v1747
        %v1749 = vsub.f32 1.0, %v1748
        %v1750 = vmul.f32 %v1747, %v1749
        %v1751 = vadd.f32 %v1747, %v1750
        %vm1752 = vweird.f32 %v1717
        %vm1753 = vweird.f32 %v1747
        %vm1754 = vmor %vm1752, %vm1753
        %v1755 = vsel %vm1754, %v1747, %v1751
        %v1756 = vand.u32 2147483647, %v1717
        %vm1757 = vcmp.eq.f32.partialorder %v1756, 8.507059e+37
        %v1758 = vand.u32 %v1717, 2147483648
        %v1759 = vor.u32 1.1754944e-38, %v1758
        %v1760 = vsel %vm1757, %v1759, %v1755
        %v1761 = vmul.f32 1.0, %v1760
        %v1762 = vrcp.pop %v1718
        %v1763 = vmul.f32 %v1718, %v1762
        %v1764 = vsub.f32 1.0, %v1763
        %v1765 = vmul.f32 %v1762, %v1764
        %v1766 = vadd.f32 %v1762, %v1765
        %vm1767 = vweird.f32 %v1718
        %vm1768 = vweird.f32 %v1762
        %vm1769 = vmor %vm1767, %vm1768
        %v1770 = vsel %vm1769, %v1762, %v1766
        %v1771 = vand.u32 2147483647, %v1718
        %vm1772 = vcmp.eq.f32.partialorder %v1771, 8.507059e+37
        %v1773 = vand.u32 %v1718, 2147483648
        %v1774 = vor.u32 1.1754944e-38, %v1773
        %v1775 = vsel %vm1772, %v1774, %v1770
        %v1776 = vmul.f32 1.0, %v1775
        %v1777 = vrcp.pop %v1719
        %v1778 = vmul.f32 %v1719, %v1777
        %v1779 = vsub.f32 1.0, %v1778
        %v1780 = vmul.f32 %v1777, %v1779
        %v1781 = vadd.f32 %v1777, %v1780
        %vm1782 = vweird.f32 %v1719
        %vm1783 = vweird.f32 %v1777
        %vm1784 = vmor %vm1782, %vm1783
        %v1785 = vsel %vm1784, %v1777, %v1781
        %v1786 = vand.u32 2147483647, %v1719
        %vm1787 = vcmp.eq.f32.partialorder %v1786, 8.507059e+37
        %v1788 = vand.u32 %v1719, 2147483648
        %v1789 = vor.u32 1.1754944e-38, %v1788
        %v1790 = vsel %vm1787, %v1789, %v1785
        %v1791 = vmul.f32 1.0, %v1790
        %v1792 = vrcp.pop %v1720
        %v1793 = vmul.f32 %v1720, %v1792
        %v1794 = vsub.f32 1.0, %v1793
        %v1795 = vmul.f32 %v1792, %v1794
        %v1796 = vadd.f32 %v1792, %v1795
        %vm1797 = vweird.f32 %v1720
        %vm1798 = vweird.f32 %v1792
        %vm1799 = vmor %vm1797, %vm1798
        %v1800 = vsel %vm1799, %v1792, %v1796
        %v1801 = vand.u32 2147483647, %v1720
        %vm1802 = vcmp.eq.f32.partialorder %v1801, 8.507059e+37
        %v1803 = vand.u32 %v1720, 2147483648
        %v1804 = vor.u32 1.1754944e-38, %v1803
        %v1805 = vsel %vm1802, %v1804, %v1800
        %v1806 = vmul.f32 1.0, %v1805
        %v1807 = vrcp.pop %v1721
        %v1808 = vmul.f32 %v1721, %v1807
        %v1809 = vsub.f32 1.0, %v1808
        %v1810 = vmul.f32 %v1807, %v1809
        %v1811 = vadd.f32 %v1807, %v1810
        %vm1812 = vweird.f32 %v1721
        %vm1813 = vweird.f32 %v1807
        %vm1814 = vmor %vm1812, %vm1813
        %v1815 = vsel %vm1814, %v1807, %v1811
        %v1816 = vand.u32 2147483647, %v1721
        %vm1817 = vcmp.eq.f32.partialorder %v1816, 8.507059e+37
        %v1818 = vand.u32 %v1721, 2147483648
        %v1819 = vor.u32 1.1754944e-38, %v1818
        %v1820 = vsel %vm1817, %v1819, %v1815
        %v1821 = vmul.f32 1.0, %v1820
        %v1822 = vrcp.pop %v1722
        %v1823 = vmul.f32 %v1722, %v1822
        %v1824 = vsub.f32 1.0, %v1823
        %v1825 = vmul.f32 %v1822, %v1824
        %v1826 = vadd.f32 %v1822, %v1825
        %vm1827 = vweird.f32 %v1722
        %vm1828 = vweird.f32 %v1822
        %vm1829 = vmor %vm1827, %vm1828
        %v1830 = vsel %vm1829, %v1822, %v1826
        %v1831 = vand.u32 2147483647, %v1722
        %vm1832 = vcmp.eq.f32.partialorder %v1831, 8.507059e+37
        %v1833 = vand.u32 %v1722, 2147483648
        %v1834 = vor.u32 1.1754944e-38, %v1833
        %v1835 = vsel %vm1832, %v1834, %v1830
        %v1836 = vmul.f32 1.0, %v1835
        %v1837 = vrcp.pop %v1723
        %v1838 = vmul.f32 %v1723, %v1837
        %v1839 = vsub.f32 1.0, %v1838
        %v1840 = vmul.f32 %v1837, %v1839
        %v1841 = vadd.f32 %v1837, %v1840
        %vm1842 = vweird.f32 %v1723
        %vm1843 = vweird.f32 %v1837
        %vm1844 = vmor %vm1842, %vm1843
        %v1845 = vsel %vm1844, %v1837, %v1841
        %v1846 = vand.u32 2147483647, %v1723
        %vm1847 = vcmp.eq.f32.partialorder %v1846, 8.507059e+37
        %v1848 = vand.u32 %v1723, 2147483648
        %v1849 = vor.u32 1.1754944e-38, %v1848
        %v1850 = vsel %vm1847, %v1849, %v1845
        %v1851 = vmul.f32 1.0, %v1850
        %v1852 = vrcp.pop %v1724
        %v1853 = vmul.f32 %v1724, %v1852
        %v1854 = vsub.f32 1.0, %v1853
        %v1855 = vmul.f32 %v1852, %v1854
        %v1856 = vadd.f32 %v1852, %v1855
        %vm1857 = vweird.f32 %v1724
        %vm1858 = vweird.f32 %v1852
        %vm1859 = vmor %vm1857, %vm1858
        %v1860 = vsel %vm1859, %v1852, %v1856
        %v1861 = vand.u32 2147483647, %v1724
        %vm1862 = vcmp.eq.f32.partialorder %v1861, 8.507059e+37
        %v1863 = vand.u32 %v1724, 2147483648
        %v1864 = vor.u32 1.1754944e-38, %v1863
        %v1865 = vsel %vm1862, %v1864, %v1860
        %v1866 = vmul.f32 1.0, %v1865
        %v1867 = vrcp.pop %v1725
        %v1868 = vmul.f32 %v1725, %v1867
        %v1869 = vsub.f32 1.0, %v1868
        %v1870 = vmul.f32 %v1867, %v1869
        %v1871 = vadd.f32 %v1867, %v1870
        %vm1872 = vweird.f32 %v1725
        %vm1873 = vweird.f32 %v1867
        %vm1874 = vmor %vm1872, %vm1873
        %v1875 = vsel %vm1874, %v1867, %v1871
        %v1876 = vand.u32 2147483647, %v1725
        %vm1877 = vcmp.eq.f32.partialorder %v1876, 8.507059e+37
        %v1878 = vand.u32 %v1725, 2147483648
        %v1879 = vor.u32 1.1754944e-38, %v1878
        %v1880 = vsel %vm1877, %v1879, %v1875
        %v1881 = vmul.f32 1.0, %v1880
        %v1882 = vrcp.pop %v1726
        %v1883 = vmul.f32 %v1726, %v1882
        %v1884 = vsub.f32 1.0, %v1883
        %v1885 = vmul.f32 %v1882, %v1884
        %v1886 = vadd.f32 %v1882, %v1885
        %vm1887 = vweird.f32 %v1726
        %vm1888 = vweird.f32 %v1882
        %vm1889 = vmor %vm1887, %vm1888
        %v1890 = vsel %vm1889, %v1882, %v1886
        %v1891 = vand.u32 2147483647, %v1726
        %vm1892 = vcmp.eq.f32.partialorder %v1891, 8.507059e+37
        %v1893 = vand.u32 %v1726, 2147483648
        %v1894 = vor.u32 1.1754944e-38, %v1893
        %v1895 = vsel %vm1892, %v1894, %v1890
        %v1896 = vmul.f32 1.0, %v1895
        %v1897 = vrcp.pop %v1727
        %v1898 = vmul.f32 %v1727, %v1897
        %v1899 = vsub.f32 1.0, %v1898
        %v1900 = vmul.f32 %v1897, %v1899
        %v1901 = vadd.f32 %v1897, %v1900
        %vm1902 = vweird.f32 %v1727
        %vm1903 = vweird.f32 %v1897
        %vm1904 = vmor %vm1902, %vm1903
        %v1905 = vsel %vm1904, %v1897, %v1901
        %v1906 = vand.u32 2147483647, %v1727
        %vm1907 = vcmp.eq.f32.partialorder %v1906, 8.507059e+37
        %v1908 = vand.u32 %v1727, 2147483648
        %v1909 = vor.u32 1.1754944e-38, %v1908
        %v1910 = vsel %vm1907, %v1909, %v1905
        %v1911 = vmul.f32 1.0, %v1910
        %v1912 = vrcp.pop %v1728
        %v1913 = vmul.f32 %v1728, %v1912
        %v1914 = vsub.f32 1.0, %v1913
        %v1915 = vmul.f32 %v1912, %v1914
        %v1916 = vadd.f32 %v1912, %v1915
        %vm1917 = vweird.f32 %v1728
        %vm1918 = vweird.f32 %v1912
        %vm1919 = vmor %vm1917, %vm1918
        %v1920 = vsel %vm1919, %v1912, %v1916
        %v1921 = vand.u32 2147483647, %v1728
        %vm1922 = vcmp.eq.f32.partialorder %v1921, 8.507059e+37
        %v1923 = vand.u32 %v1728, 2147483648
        %v1924 = vor.u32 1.1754944e-38, %v1923
        %v1925 = vsel %vm1922, %v1924, %v1920
        %v1926 = vmul.f32 1.0, %v1925
        %v1927 = vrcp.pop %v1729
        %v1928 = vmul.f32 %v1729, %v1927
        %v1929 = vsub.f32 1.0, %v1928
        %v1930 = vmul.f32 %v1927, %v1929
        %v1931 = vadd.f32 %v1927, %v1930
        %vm1932 = vweird.f32 %v1729
        %vm1933 = vweird.f32 %v1927
        %vm1934 = vmor %vm1932, %vm1933
        %v1935 = vsel %vm1934, %v1927, %v1931
        %v1936 = vand.u32 2147483647, %v1729
        %vm1937 = vcmp.eq.f32.partialorder %v1936, 8.507059e+37
        %v1938 = vand.u32 %v1729, 2147483648
        %v1939 = vor.u32 1.1754944e-38, %v1938
        %v1940 = vsel %vm1937, %v1939, %v1935
        %v1941 = vmul.f32 1.0, %v1940
        %v1942 = vrcp.pop %v1730
        %v1943 = vmul.f32 %v1730, %v1942
        %v1944 = vsub.f32 1.0, %v1943
        %v1945 = vmul.f32 %v1942, %v1944
        %v1946 = vadd.f32 %v1942, %v1945
        %vm1947 = vweird.f32 %v1730
        %vm1948 = vweird.f32 %v1942
        %vm1949 = vmor %vm1947, %vm1948
        %v1950 = vsel %vm1949, %v1942, %v1946
        %v1951 = vand.u32 2147483647, %v1730
        %vm1952 = vcmp.eq.f32.partialorder %v1951, 8.507059e+37
        %v1953 = vand.u32 %v1730, 2147483648
        %v1954 = vor.u32 1.1754944e-38, %v1953
        %v1955 = vsel %vm1952, %v1954, %v1950
        %v1956 = vmul.f32 1.0, %v1955
        %v1957 = vrcp.pop %v1731
        %v1958 = vmul.f32 %v1731, %v1957
        %v1959 = vsub.f32 1.0, %v1958
        %v1960 = vmul.f32 %v1957, %v1959
        %v1961 = vadd.f32 %v1957, %v1960
        %vm1962 = vweird.f32 %v1731
        %vm1963 = vweird.f32 %v1957
        %vm1964 = vmor %vm1962, %vm1963
        %v1965 = vsel %vm1964, %v1957, %v1961
        %v1966 = vand.u32 2147483647, %v1731
        %vm1967 = vcmp.eq.f32.partialorder %v1966, 8.507059e+37
        %v1968 = vand.u32 %v1731, 2147483648
        %v1969 = vor.u32 1.1754944e-38, %v1968
        %v1970 = vsel %vm1967, %v1969, %v1965
        %v1971 = vmul.f32 1.0, %v1970
        %v1972 = vmul.f32 %v1629, %v1746
        %v1973 = vmul.f32 %v1631, %v1761
        %v1974 = vmul.f32 %v1634, %v1776
        %v1975 = vmul.f32 %v1636, %v1791
        %v1976 = vmul.f32 %v1639, %v1806
        %v1977 = vmul.f32 %v1641, %v1821
        %v1978 = vmul.f32 %v1644, %v1836
        %v1979 = vmul.f32 %v1646, %v1851
        %v1980 = vmul.f32 %v1649, %v1866
        %v1981 = vmul.f32 %v1651, %v1881
        %v1982 = vmul.f32 %v1654, %v1896
        %v1983 = vmul.f32 %v1656, %v1911
        %v1984 = vmul.f32 %v1659, %v1926
        %v1985 = vmul.f32 %v1661, %v1941
        %v1986 = vmul.f32 %v1664, %v1956
        %v1987 = vmul.f32 %v1666, %v1971
        %v1988 = vxor.u32 %v1972, 2147483648
        %v1989 = vxor.u32 %v1973, 2147483648
        %v1990 = vxor.u32 %v1974, 2147483648
        %v1991 = vxor.u32 %v1975, 2147483648
        %v1992 = vxor.u32 %v1976, 2147483648
        %v1993 = vxor.u32 %v1977, 2147483648
        %v1994 = vxor.u32 %v1978, 2147483648
        %v1995 = vxor.u32 %v1979, 2147483648
        %v1996 = vxor.u32 %v1980, 2147483648
        %v1997 = vxor.u32 %v1981, 2147483648
        %v1998 = vxor.u32 %v1982, 2147483648
        %v1999 = vxor.u32 %v1983, 2147483648
        %v2000 = vxor.u32 %v1984, 2147483648
        %v2001 = vxor.u32 %v1985, 2147483648
        %v2002 = vxor.u32 %v1986, 2147483648
        %v2003 = vxor.u32 %v1987, 2147483648
        %v2004 = vmul.f32 %v1988, 1.442695
        %v2005 = vpow.pop %v2004
        %v2006 = vmul.f32 %v1989, 1.442695
        %v2007 = vpow.pop %v2006
        %v2008 = vmul.f32 %v1990, 1.442695
        %v2009 = vpow.pop %v2008
        %v2010 = vmul.f32 %v1991, 1.442695
        %v2011 = vpow.pop %v2010
        %v2012 = vmul.f32 %v1992, 1.442695
        %v2013 = vpow.pop %v2012
        %v2014 = vmul.f32 %v1993, 1.442695
        %v2015 = vpow.pop %v2014
        %v2016 = vmul.f32 %v1994, 1.442695
        %v2017 = vpow.pop %v2016
        %v2018 = vmul.f32 %v1995, 1.442695
        %v2019 = vpow.pop %v2018
        %v2020 = vmul.f32 %v1996, 1.442695
        %v2021 = vpow.pop %v2020
        %v2022 = vmul.f32 %v1997, 1.442695
        %v2023 = vpow.pop %v2022
        %v2024 = vmul.f32 %v1998, 1.442695
        %v2025 = vpow.pop %v2024
        %v2026 = vmul.f32 %v1999, 1.442695
        %v2027 = vpow.pop %v2026
        %v2028 = vmul.f32 %v2000, 1.442695
        %v2029 = vpow.pop %v2028
        %v2030 = vmul.f32 %v2001, 1.442695
        %v2031 = vpow.pop %v2030
        %v2032 = vmul.f32 %v2002, 1.442695
        %v2033 = vpow.pop %v2032
        %v2034 = vmul.f32 %v2003, 1.442695
        %v2035 = vpow.pop %v2034
        %v2036 = vadd.f32 %v2005, 1.0
        %v2037 = vadd.f32 %v2007, 1.0
        %v2038 = vadd.f32 %v2009, 1.0
        %v2039 = vadd.f32 %v2011, 1.0
        %v2040 = vadd.f32 %v2013, 1.0
        %v2041 = vadd.f32 %v2015, 1.0
        %v2042 = vadd.f32 %v2017, 1.0
        %v2043 = vadd.f32 %v2019, 1.0
        %v2044 = vadd.f32 %v2021, 1.0
        %v2045 = vadd.f32 %v2023, 1.0
        %v2046 = vadd.f32 %v2025, 1.0
        %v2047 = vadd.f32 %v2027, 1.0
        %v2048 = vadd.f32 %v2029, 1.0
        %v2049 = vadd.f32 %v2031, 1.0
        %v2050 = vadd.f32 %v2033, 1.0
        %v2051 = vadd.f32 %v2035, 1.0
        %v2052 = vrcp.pop %v2036
        %v2053 = vmul.f32 %v2036, %v2052
        %v2054 = vsub.f32 1.0, %v2053
        %v2055 = vmul.f32 %v2052, %v2054
        %v2056 = vadd.f32 %v2052, %v2055
        %vm2057 = vweird.f32 %v2036
        %vm2058 = vweird.f32 %v2052
        %vm2059 = vmor %vm2057, %vm2058
        %v2060 = vsel %vm2059, %v2052, %v2056
        %v2061 = vand.u32 2147483647, %v2036
        %vm2062 = vcmp.eq.f32.partialorder %v2061, 8.507059e+37
        %v2063 = vand.u32 %v2036, 2147483648
        %v2064 = vor.u32 1.1754944e-38, %v2063
        %v2065 = vsel %vm2062, %v2064, %v2060
        %v2066 = vmul.f32 1.0, %v2065
        %v2067 = vrcp.pop %v2037
        %v2068 = vmul.f32 %v2037, %v2067
        %v2069 = vsub.f32 1.0, %v2068
        %v2070 = vmul.f32 %v2067, %v2069
        %v2071 = vadd.f32 %v2067, %v2070
        %vm2072 = vweird.f32 %v2037
        %vm2073 = vweird.f32 %v2067
        %vm2074 = vmor %vm2072, %vm2073
        %v2075 = vsel %vm2074, %v2067, %v2071
        %v2076 = vand.u32 2147483647, %v2037
        %vm2077 = vcmp.eq.f32.partialorder %v2076, 8.507059e+37
        %v2078 = vand.u32 %v2037, 2147483648
        %v2079 = vor.u32 1.1754944e-38, %v2078
        %v2080 = vsel %vm2077, %v2079, %v2075
        %v2081 = vmul.f32 1.0, %v2080
        %v2082 = vrcp.pop %v2038
        %v2083 = vmul.f32 %v2038, %v2082
        %v2084 = vsub.f32 1.0, %v2083
        %v2085 = vmul.f32 %v2082, %v2084
        %v2086 = vadd.f32 %v2082, %v2085
        %vm2087 = vweird.f32 %v2038
        %vm2088 = vweird.f32 %v2082
        %vm2089 = vmor %vm2087, %vm2088
        %v2090 = vsel %vm2089, %v2082, %v2086
        %v2091 = vand.u32 2147483647, %v2038
        %vm2092 = vcmp.eq.f32.partialorder %v2091, 8.507059e+37
        %v2093 = vand.u32 %v2038, 2147483648
        %v2094 = vor.u32 1.1754944e-38, %v2093
        %v2095 = vsel %vm2092, %v2094, %v2090
        %v2096 = vmul.f32 1.0, %v2095
        %v2097 = vrcp.pop %v2039
        %v2098 = vmul.f32 %v2039, %v2097
        %v2099 = vsub.f32 1.0, %v2098
        %v2100 = vmul.f32 %v2097, %v2099
        %v2101 = vadd.f32 %v2097, %v2100
        %vm2102 = vweird.f32 %v2039
        %vm2103 = vweird.f32 %v2097
        %vm2104 = vmor %vm2102, %vm2103
        %v2105 = vsel %vm2104, %v2097, %v2101
        %v2106 = vand.u32 2147483647, %v2039
        %vm2107 = vcmp.eq.f32.partialorder %v2106, 8.507059e+37
        %v2108 = vand.u32 %v2039, 2147483648
        %v2109 = vor.u32 1.1754944e-38, %v2108
        %v2110 = vsel %vm2107, %v2109, %v2105
        %v2111 = vmul.f32 1.0, %v2110
        %v2112 = vrcp.pop %v2040
        %v2113 = vmul.f32 %v2040, %v2112
        %v2114 = vsub.f32 1.0, %v2113
        %v2115 = vmul.f32 %v2112, %v2114
        %v2116 = vadd.f32 %v2112, %v2115
        %vm2117 = vweird.f32 %v2040
        %vm2118 = vweird.f32 %v2112
        %vm2119 = vmor %vm2117, %vm2118
        %v2120 = vsel %vm2119, %v2112, %v2116
        %v2121 = vand.u32 2147483647, %v2040
        %vm2122 = vcmp.eq.f32.partialorder %v2121, 8.507059e+37
        %v2123 = vand.u32 %v2040, 2147483648
        %v2124 = vor.u32 1.1754944e-38, %v2123
        %v2125 = vsel %vm2122, %v2124, %v2120
        %v2126 = vmul.f32 1.0, %v2125
        %v2127 = vrcp.pop %v2041
        %v2128 = vmul.f32 %v2041, %v2127
        %v2129 = vsub.f32 1.0, %v2128
        %v2130 = vmul.f32 %v2127, %v2129
        %v2131 = vadd.f32 %v2127, %v2130
        %vm2132 = vweird.f32 %v2041
        %vm2133 = vweird.f32 %v2127
        %vm2134 = vmor %vm2132, %vm2133
        %v2135 = vsel %vm2134, %v2127, %v2131
        %v2136 = vand.u32 2147483647, %v2041
        %vm2137 = vcmp.eq.f32.partialorder %v2136, 8.507059e+37
        %v2138 = vand.u32 %v2041, 2147483648
        %v2139 = vor.u32 1.1754944e-38, %v2138
        %v2140 = vsel %vm2137, %v2139, %v2135
        %v2141 = vmul.f32 1.0, %v2140
        %v2142 = vrcp.pop %v2042
        %v2143 = vmul.f32 %v2042, %v2142
        %v2144 = vsub.f32 1.0, %v2143
        %v2145 = vmul.f32 %v2142, %v2144
        %v2146 = vadd.f32 %v2142, %v2145
        %vm2147 = vweird.f32 %v2042
        %vm2148 = vweird.f32 %v2142
        %vm2149 = vmor %vm2147, %vm2148
        %v2150 = vsel %vm2149, %v2142, %v2146
        %v2151 = vand.u32 2147483647, %v2042
        %vm2152 = vcmp.eq.f32.partialorder %v2151, 8.507059e+37
        %v2153 = vand.u32 %v2042, 2147483648
        %v2154 = vor.u32 1.1754944e-38, %v2153
        %v2155 = vsel %vm2152, %v2154, %v2150
        %v2156 = vmul.f32 1.0, %v2155
        %v2157 = vrcp.pop %v2043
        %v2158 = vmul.f32 %v2043, %v2157
        %v2159 = vsub.f32 1.0, %v2158
        %v2160 = vmul.f32 %v2157, %v2159
        %v2161 = vadd.f32 %v2157, %v2160
        %vm2162 = vweird.f32 %v2043
        %vm2163 = vweird.f32 %v2157
        %vm2164 = vmor %vm2162, %vm2163
        %v2165 = vsel %vm2164, %v2157, %v2161
        %v2166 = vand.u32 2147483647, %v2043
        %vm2167 = vcmp.eq.f32.partialorder %v2166, 8.507059e+37
        %v2168 = vand.u32 %v2043, 2147483648
        %v2169 = vor.u32 1.1754944e-38, %v2168
        %v2170 = vsel %vm2167, %v2169, %v2165
        %v2171 = vmul.f32 1.0, %v2170
        %v2172 = vrcp.pop %v2044
        %v2173 = vmul.f32 %v2044, %v2172
        %v2174 = vsub.f32 1.0, %v2173
        %v2175 = vmul.f32 %v2172, %v2174
        %v2176 = vadd.f32 %v2172, %v2175
        %vm2177 = vweird.f32 %v2044
        %vm2178 = vweird.f32 %v2172
        %vm2179 = vmor %vm2177, %vm2178
        %v2180 = vsel %vm2179, %v2172, %v2176
        %v2181 = vand.u32 2147483647, %v2044
        %vm2182 = vcmp.eq.f32.partialorder %v2181, 8.507059e+37
        %v2183 = vand.u32 %v2044, 2147483648
        %v2184 = vor.u32 1.1754944e-38, %v2183
        %v2185 = vsel %vm2182, %v2184, %v2180
        %v2186 = vmul.f32 1.0, %v2185
        %v2187 = vrcp.pop %v2045
        %v2188 = vmul.f32 %v2045, %v2187
        %v2189 = vsub.f32 1.0, %v2188
        %v2190 = vmul.f32 %v2187, %v2189
        %v2191 = vadd.f32 %v2187, %v2190
        %vm2192 = vweird.f32 %v2045
        %vm2193 = vweird.f32 %v2187
        %vm2194 = vmor %vm2192, %vm2193
        %v2195 = vsel %vm2194, %v2187, %v2191
        %v2196 = vand.u32 2147483647, %v2045
        %vm2197 = vcmp.eq.f32.partialorder %v2196, 8.507059e+37
        %v2198 = vand.u32 %v2045, 2147483648
        %v2199 = vor.u32 1.1754944e-38, %v2198
        %v2200 = vsel %vm2197, %v2199, %v2195
        %v2201 = vmul.f32 1.0, %v2200
        %v2202 = vrcp.pop %v2046
        %v2203 = vmul.f32 %v2046, %v2202
        %v2204 = vsub.f32 1.0, %v2203
        %v2205 = vmul.f32 %v2202, %v2204
        %v2206 = vadd.f32 %v2202, %v2205
        %vm2207 = vweird.f32 %v2046
        %vm2208 = vweird.f32 %v2202
        %vm2209 = vmor %vm2207, %vm2208
        %v2210 = vsel %vm2209, %v2202, %v2206
        %v2211 = vand.u32 2147483647, %v2046
        %vm2212 = vcmp.eq.f32.partialorder %v2211, 8.507059e+37
        %v2213 = vand.u32 %v2046, 2147483648
        %v2214 = vor.u32 1.1754944e-38, %v2213
        %v2215 = vsel %vm2212, %v2214, %v2210
        %v2216 = vmul.f32 1.0, %v2215
        %v2217 = vrcp.pop %v2047
        %v2218 = vmul.f32 %v2047, %v2217
        %v2219 = vsub.f32 1.0, %v2218
        %v2220 = vmul.f32 %v2217, %v2219
        %v2221 = vadd.f32 %v2217, %v2220
        %vm2222 = vweird.f32 %v2047
        %vm2223 = vweird.f32 %v2217
        %vm2224 = vmor %vm2222, %vm2223
        %v2225 = vsel %vm2224, %v2217, %v2221
        %v2226 = vand.u32 2147483647, %v2047
        %vm2227 = vcmp.eq.f32.partialorder %v2226, 8.507059e+37
        %v2228 = vand.u32 %v2047, 2147483648
        %v2229 = vor.u32 1.1754944e-38, %v2228
        %v2230 = vsel %vm2227, %v2229, %v2225
        %v2231 = vmul.f32 1.0, %v2230
        %v2232 = vrcp.pop %v2048
        %v2233 = vmul.f32 %v2048, %v2232
        %v2234 = vsub.f32 1.0, %v2233
        %v2235 = vmul.f32 %v2232, %v2234
        %v2236 = vadd.f32 %v2232, %v2235
        %vm2237 = vweird.f32 %v2048
        %vm2238 = vweird.f32 %v2232
        %vm2239 = vmor %vm2237, %vm2238
        %v2240 = vsel %vm2239, %v2232, %v2236
        %v2241 = vand.u32 2147483647, %v2048
        %vm2242 = vcmp.eq.f32.partialorder %v2241, 8.507059e+37
        %v2243 = vand.u32 %v2048, 2147483648
        %v2244 = vor.u32 1.1754944e-38, %v2243
        %v2245 = vsel %vm2242, %v2244, %v2240
        %v2246 = vmul.f32 1.0, %v2245
        %v2247 = vrcp.pop %v2049
        %v2248 = vmul.f32 %v2049, %v2247
        %v2249 = vsub.f32 1.0, %v2248
        %v2250 = vmul.f32 %v2247, %v2249
        %v2251 = vadd.f32 %v2247, %v2250
        %vm2252 = vweird.f32 %v2049
        %vm2253 = vweird.f32 %v2247
        %vm2254 = vmor %vm2252, %vm2253
        %v2255 = vsel %vm2254, %v2247, %v2251
        %v2256 = vand.u32 2147483647, %v2049
        %vm2257 = vcmp.eq.f32.partialorder %v2256, 8.507059e+37
        %v2258 = vand.u32 %v2049, 2147483648
        %v2259 = vor.u32 1.1754944e-38, %v2258
        %v2260 = vsel %vm2257, %v2259, %v2255
        %v2261 = vmul.f32 1.0, %v2260
        %v2262 = vrcp.pop %v2050
        %v2263 = vmul.f32 %v2050, %v2262
        %v2264 = vsub.f32 1.0, %v2263
        %v2265 = vmul.f32 %v2262, %v2264
        %v2266 = vadd.f32 %v2262, %v2265
        %vm2267 = vweird.f32 %v2050
        %vm2268 = vweird.f32 %v2262
        %vm2269 = vmor %vm2267, %vm2268
        %v2270 = vsel %vm2269, %v2262, %v2266
        %v2271 = vand.u32 2147483647, %v2050
        %vm2272 = vcmp.eq.f32.partialorder %v2271, 8.507059e+37
        %v2273 = vand.u32 %v2050, 2147483648
        %v2274 = vor.u32 1.1754944e-38, %v2273
        %v2275 = vsel %vm2272, %v2274, %v2270
        %v2276 = vmul.f32 1.0, %v2275
        %v2277 = vrcp.pop %v2051
        %v2278 = vmul.f32 %v2051, %v2277
        %v2279 = vsub.f32 1.0, %v2278
        %v2280 = vmul.f32 %v2277, %v2279
        %v2281 = vadd.f32 %v2277, %v2280
        %vm2282 = vweird.f32 %v2051
        %vm2283 = vweird.f32 %v2277
        %vm2284 = vmor %vm2282, %vm2283
        %v2285 = vsel %vm2284, %v2277, %v2281
        %v2286 = vand.u32 2147483647, %v2051
        %vm2287 = vcmp.eq.f32.partialorder %v2286, 8.507059e+37
        %v2288 = vand.u32 %v2051, 2147483648
        %v2289 = vor.u32 1.1754944e-38, %v2288
        %v2290 = vsel %vm2287, %v2289, %v2285
        %v2291 = vmul.f32 1.0, %v2290
        %v2292 = vmul.f32 %v1972, %v2066
        %v2293 = vmul.f32 %v1973, %v2081
        %v2294 = vmul.f32 %v1974, %v2096
        %v2295 = vmul.f32 %v1975, %v2111
        %v2296 = vmul.f32 %v1976, %v2126
        %v2297 = vmul.f32 %v1977, %v2141
        %v2298 = vmul.f32 %v1978, %v2156
        %v2299 = vmul.f32 %v1979, %v2171
        %v2300 = vmul.f32 %v1980, %v2186
        %v2301 = vmul.f32 %v1981, %v2201
        %v2302 = vmul.f32 %v1982, %v2216
        %v2303 = vmul.f32 %v1983, %v2231
        %v2304 = vmul.f32 %v1984, %v2246
        %v2305 = vmul.f32 %v1985, %v2261
        %v2306 = vmul.f32 %v1986, %v2276
        %v2307 = vmul.f32 %v1987, %v2291
        %2308 = vadd.xlane.f32.xlu0 %v2292
        %v2309 = vpop.xlane.xlu0 %2308
        %2310 = vadd.xlane.f32.xlu0 %v2293
        %v2311 = vpop.xlane.xlu0 %2310
        %2312 = vadd.xlane.f32.xlu0 %v2294
        %v2313 = vpop.xlane.xlu0 %2312
        %2314 = vadd.xlane.f32.xlu0 %v2295
        %v2315 = vpop.xlane.xlu0 %2314
        %2316 = vadd.xlane.f32.xlu0 %v2296
        %v2317 = vpop.xlane.xlu0 %2316
        %2318 = vadd.xlane.f32.xlu0 %v2297
        %v2319 = vpop.xlane.xlu0 %2318
        %2320 = vadd.xlane.f32.xlu0 %v2298
        %v2321 = vpop.xlane.xlu0 %2320
        %2322 = vadd.xlane.f32.xlu0 %v2299
        %v2323 = vpop.xlane.xlu0 %2322
        %2324 = vadd.xlane.f32.xlu0 %v2300
        %v2325 = vpop.xlane.xlu0 %2324
        %2326 = vadd.xlane.f32.xlu0 %v2301
        %v2327 = vpop.xlane.xlu0 %2326
        %2328 = vadd.xlane.f32.xlu0 %v2302
        %v2329 = vpop.xlane.xlu0 %2328
        %2330 = vadd.xlane.f32.xlu0 %v2303
        %v2331 = vpop.xlane.xlu0 %2330
        %2332 = vadd.xlane.f32.xlu0 %v2304
        %v2333 = vpop.xlane.xlu0 %2332
        %2334 = vadd.xlane.f32.xlu0 %v2305
        %v2335 = vpop.xlane.xlu0 %2334
        %2336 = vadd.xlane.f32.xlu0 %v2306
        %v2337 = vpop.xlane.xlu0 %2336
        %2338 = vadd.xlane.f32.xlu0 %v2307
        %v2339 = vpop.xlane.xlu0 %2338
        %v2340 = vmul.f32 %v2292, %v2292
        %v2341 = vmul.f32 %v2293, %v2293
        %v2342 = vmul.f32 %v2294, %v2294
        %v2343 = vmul.f32 %v2295, %v2295
        %v2344 = vmul.f32 %v2296, %v2296
        %v2345 = vmul.f32 %v2297, %v2297
        %v2346 = vmul.f32 %v2298, %v2298
        %v2347 = vmul.f32 %v2299, %v2299
        %v2348 = vmul.f32 %v2300, %v2300
        %v2349 = vmul.f32 %v2301, %v2301
        %v2350 = vmul.f32 %v2302, %v2302
        %v2351 = vmul.f32 %v2303, %v2303
        %v2352 = vmul.f32 %v2304, %v2304
        %v2353 = vmul.f32 %v2305, %v2305
        %v2354 = vmul.f32 %v2306, %v2306
        %v2355 = vmul.f32 %v2307, %v2307
        %2356 = vadd.xlane.f32.xlu0 %v2340
        %v2357 = vpop.xlane.xlu0 %2356
        %2358 = vadd.xlane.f32.xlu0 %v2341
        %v2359 = vpop.xlane.xlu0 %2358
        %2360 = vadd.xlane.f32.xlu0 %v2342
        %v2361 = vpop.xlane.xlu0 %2360
        %2362 = vadd.xlane.f32.xlu0 %v2343
        %v2363 = vpop.xlane.xlu0 %2362
        %2364 = vadd.xlane.f32.xlu0 %v2344
        %v2365 = vpop.xlane.xlu0 %2364
        %2366 = vadd.xlane.f32.xlu0 %v2345
        %v2367 = vpop.xlane.xlu0 %2366
        %2368 = vadd.xlane.f32.xlu0 %v2346
        %v2369 = vpop.xlane.xlu0 %2368
        %2370 = vadd.xlane.f32.xlu0 %v2347
        %v2371 = vpop.xlane.xlu0 %2370
        %2372 = vadd.xlane.f32.xlu0 %v2348
        %v2373 = vpop.xlane.xlu0 %2372
        %2374 = vadd.xlane.f32.xlu0 %v2349
        %v2375 = vpop.xlane.xlu0 %2374
        %2376 = vadd.xlane.f32.xlu0 %v2350
        %v2377 = vpop.xlane.xlu0 %2376
        %2378 = vadd.xlane.f32.xlu0 %v2351
        %v2379 = vpop.xlane.xlu0 %2378
        %2380 = vadd.xlane.f32.xlu0 %v2352
        %v2381 = vpop.xlane.xlu0 %2380
        %2382 = vadd.xlane.f32.xlu0 %v2353
        %v2383 = vpop.xlane.xlu0 %2382
        %2384 = vadd.xlane.f32.xlu0 %v2354
        %v2385 = vpop.xlane.xlu0 %2384
        %2386 = vadd.xlane.f32.xlu0 %v2355
        %v2387 = vpop.xlane.xlu0 %2386
        %v2388 = vmul.f32 %v2309, 0.03125
        %v2389 = vmul.f32 %v2311, 0.03125
        %v2390 = vmul.f32 %v2313, 0.03125
        %v2391 = vmul.f32 %v2315, 0.03125
        %v2392 = vmul.f32 %v2317, 0.03125
        %v2393 = vmul.f32 %v2319, 0.03125
        %v2394 = vmul.f32 %v2321, 0.03125
        %v2395 = vmul.f32 %v2323, 0.03125
        %v2396 = vmul.f32 %v2325, 0.03125
        %v2397 = vmul.f32 %v2327, 0.03125
        %v2398 = vmul.f32 %v2329, 0.03125
        %v2399 = vmul.f32 %v2331, 0.03125
        %v2400 = vmul.f32 %v2333, 0.03125
        %v2401 = vmul.f32 %v2335, 0.03125
        %v2402 = vmul.f32 %v2337, 0.03125
        %v2403 = vmul.f32 %v2339, 0.03125
        %v2404 = vmul.f32 %v2357, 0.03125
        %v2405 = vmul.f32 %v2359, 0.03125
        %v2406 = vmul.f32 %v2361, 0.03125
        %v2407 = vmul.f32 %v2363, 0.03125
        %v2408 = vmul.f32 %v2365, 0.03125
        %v2409 = vmul.f32 %v2367, 0.03125
        %v2410 = vmul.f32 %v2369, 0.03125
        %v2411 = vmul.f32 %v2371, 0.03125
        %v2412 = vmul.f32 %v2373, 0.03125
        %v2413 = vmul.f32 %v2375, 0.03125
        %v2414 = vmul.f32 %v2377, 0.03125
        %v2415 = vmul.f32 %v2379, 0.03125
        %v2416 = vmul.f32 %v2381, 0.03125
        %v2417 = vmul.f32 %v2383, 0.03125
        %v2418 = vmul.f32 %v2385, 0.03125
        %v2419 = vmul.f32 %v2387, 0.03125
        %v2420 = vmul.f32 %v2388, %v2388
        %v2421 = vmul.f32 %v2389, %v2389
        %v2422 = vmul.f32 %v2390, %v2390
        %v2423 = vmul.f32 %v2391, %v2391
        %v2424 = vmul.f32 %v2392, %v2392
        %v2425 = vmul.f32 %v2393, %v2393
        %v2426 = vmul.f32 %v2394, %v2394
        %v2427 = vmul.f32 %v2395, %v2395
        %v2428 = vmul.f32 %v2396, %v2396
        %v2429 = vmul.f32 %v2397, %v2397
        %v2430 = vmul.f32 %v2398, %v2398
        %v2431 = vmul.f32 %v2399, %v2399
        %v2432 = vmul.f32 %v2400, %v2400
        %v2433 = vmul.f32 %v2401, %v2401
        %v2434 = vmul.f32 %v2402, %v2402
        %v2435 = vmul.f32 %v2403, %v2403
        %v2436 = vsub.f32 %v2404, %v2420
        %v2437 = vsub.f32 %v2405, %v2421
        %v2438 = vsub.f32 %v2406, %v2422
        %v2439 = vsub.f32 %v2407, %v2423
        %v2440 = vsub.f32 %v2408, %v2424
        %v2441 = vsub.f32 %v2409, %v2425
        %v2442 = vsub.f32 %v2410, %v2426
        %v2443 = vsub.f32 %v2411, %v2427
        %v2444 = vsub.f32 %v2412, %v2428
        %v2445 = vsub.f32 %v2413, %v2429
        %v2446 = vsub.f32 %v2414, %v2430
        %v2447 = vsub.f32 %v2415, %v2431
        %v2448 = vsub.f32 %v2416, %v2432
        %v2449 = vsub.f32 %v2417, %v2433
        %v2450 = vsub.f32 %v2418, %v2434
        %v2451 = vsub.f32 %v2419, %v2435
        %v2452 = vsub.f32 %v2292, %v2388
        %v2453 = vsub.f32 %v2293, %v2389
        %v2454 = vsub.f32 %v2294, %v2390
        %v2455 = vsub.f32 %v2295, %v2391
        %v2456 = vsub.f32 %v2296, %v2392
        %v2457 = vsub.f32 %v2297, %v2393
        %v2458 = vsub.f32 %v2298, %v2394
        %v2459 = vsub.f32 %v2299, %v2395
        %v2460 = vsub.f32 %v2300, %v2396
        %v2461 = vsub.f32 %v2301, %v2397
        %v2462 = vsub.f32 %v2302, %v2398
        %v2463 = vsub.f32 %v2303, %v2399
        %v2464 = vsub.f32 %v2304, %v2400
        %v2465 = vsub.f32 %v2305, %v2401
        %v2466 = vsub.f32 %v2306, %v2402
        %v2467 = vsub.f32 %v2307, %v2403
        %v2468 = vadd.f32 %v2436, 1e-05
        %v2469 = vadd.f32 %v2437, 1e-05
        %v2470 = vadd.f32 %v2438, 1e-05
        %v2471 = vadd.f32 %v2439, 1e-05
        %v2472 = vadd.f32 %v2440, 1e-05
        %v2473 = vadd.f32 %v2441, 1e-05
        %v2474 = vadd.f32 %v2442, 1e-05
        %v2475 = vadd.f32 %v2443, 1e-05
        %v2476 = vadd.f32 %v2444, 1e-05
        %v2477 = vadd.f32 %v2445, 1e-05
        %v2478 = vadd.f32 %v2446, 1e-05
        %v2479 = vadd.f32 %v2447, 1e-05
        %v2480 = vadd.f32 %v2448, 1e-05
        %v2481 = vadd.f32 %v2449, 1e-05
        %v2482 = vadd.f32 %v2450, 1e-05
        %v2483 = vadd.f32 %v2451, 1e-05
        %v2484 = vrsqrt.pop %v2468
        %v2485 = vmul.f32 %v2484, %v2468
        %v2486 = vmul.f32 %v2485, %v2484
        %v2487 = vmul.f32 0.5, %v2486
        %v2488 = vsub.f32 1.5, %v2487
        %v2489 = vmul.f32 %v2484, %v2488
        %vm2490 = vweird.f32 %v2468
        %vm2491 = vweird.f32 %v2484
        %vm2492 = vmor %vm2490, %vm2491
        %v2493 = vsel %vm2492, %v2484, %v2489
        %v2494 = vrsqrt.pop %v2469
        %v2495 = vmul.f32 %v2494, %v2469
        %v2496 = vmul.f32 %v2495, %v2494
        %v2497 = vmul.f32 0.5, %v2496
        %v2498 = vsub.f32 1.5, %v2497
        %v2499 = vmul.f32 %v2494, %v2498
        %vm2500 = vweird.f32 %v2469
        %vm2501 = vweird.f32 %v2494
        %vm2502 = vmor %vm2500, %vm2501
        %v2503 = vsel %vm2502, %v2494, %v2499
        %v2504 = vrsqrt.pop %v2470
        %v2505 = vmul.f32 %v2504, %v2470
        %v2506 = vmul.f32 %v2505, %v2504
        %v2507 = vmul.f32 0.5, %v2506
        %v2508 = vsub.f32 1.5, %v2507
        %v2509 = vmul.f32 %v2504, %v2508
        %vm2510 = vweird.f32 %v2470
        %vm2511 = vweird.f32 %v2504
        %vm2512 = vmor %vm2510, %vm2511
        %v2513 = vsel %vm2512, %v2504, %v2509
        %v2514 = vrsqrt.pop %v2471
        %v2515 = vmul.f32 %v2514, %v2471
        %v2516 = vmul.f32 %v2515, %v2514
        %v2517 = vmul.f32 0.5, %v2516
        %v2518 = vsub.f32 1.5, %v2517
        %v2519 = vmul.f32 %v2514, %v2518
        %vm2520 = vweird.f32 %v2471
        %vm2521 = vweird.f32 %v2514
        %vm2522 = vmor %vm2520, %vm2521
        %v2523 = vsel %vm2522, %v2514, %v2519
        %v2524 = vrsqrt.pop %v2472
        %v2525 = vmul.f32 %v2524, %v2472
        %v2526 = vmul.f32 %v2525, %v2524
        %v2527 = vmul.f32 0.5, %v2526
        %v2528 = vsub.f32 1.5, %v2527
        %v2529 = vmul.f32 %v2524, %v2528
        %vm2530 = vweird.f32 %v2472
        %vm2531 = vweird.f32 %v2524
        %vm2532 = vmor %vm2530, %vm2531
        %v2533 = vsel %vm2532, %v2524, %v2529
        %v2534 = vrsqrt.pop %v2473
        %v2535 = vmul.f32 %v2534, %v2473
        %v2536 = vmul.f32 %v2535, %v2534
        %v2537 = vmul.f32 0.5, %v2536
        %v2538 = vsub.f32 1.5, %v2537
        %v2539 = vmul.f32 %v2534, %v2538
        %vm2540 = vweird.f32 %v2473
        %vm2541 = vweird.f32 %v2534
        %vm2542 = vmor %vm2540, %vm2541
        %v2543 = vsel %vm2542, %v2534, %v2539
        %v2544 = vrsqrt.pop %v2474
        %v2545 = vmul.f32 %v2544, %v2474
        %v2546 = vmul.f32 %v2545, %v2544
        %v2547 = vmul.f32 0.5, %v2546
        %v2548 = vsub.f32 1.5, %v2547
        %v2549 = vmul.f32 %v2544, %v2548
        %vm2550 = vweird.f32 %v2474
        %vm2551 = vweird.f32 %v2544
        %vm2552 = vmor %vm2550, %vm2551
        %v2553 = vsel %vm2552, %v2544, %v2549
        %v2554 = vrsqrt.pop %v2475
        %v2555 = vmul.f32 %v2554, %v2475
        %v2556 = vmul.f32 %v2555, %v2554
        %v2557 = vmul.f32 0.5, %v2556
        %v2558 = vsub.f32 1.5, %v2557
        %v2559 = vmul.f32 %v2554, %v2558
        %vm2560 = vweird.f32 %v2475
        %vm2561 = vweird.f32 %v2554
        %vm2562 = vmor %vm2560, %vm2561
        %v2563 = vsel %vm2562, %v2554, %v2559
        %v2564 = vrsqrt.pop %v2476
        %v2565 = vmul.f32 %v2564, %v2476
        %v2566 = vmul.f32 %v2565, %v2564
        %v2567 = vmul.f32 0.5, %v2566
        %v2568 = vsub.f32 1.5, %v2567
        %v2569 = vmul.f32 %v2564, %v2568
        %vm2570 = vweird.f32 %v2476
        %vm2571 = vweird.f32 %v2564
        %vm2572 = vmor %vm2570, %vm2571
        %v2573 = vsel %vm2572, %v2564, %v2569
        %v2574 = vrsqrt.pop %v2477
        %v2575 = vmul.f32 %v2574, %v2477
        %v2576 = vmul.f32 %v2575, %v2574
        %v2577 = vmul.f32 0.5, %v2576
        %v2578 = vsub.f32 1.5, %v2577
        %v2579 = vmul.f32 %v2574, %v2578
        %vm2580 = vweird.f32 %v2477
        %vm2581 = vweird.f32 %v2574
        %vm2582 = vmor %vm2580, %vm2581
        %v2583 = vsel %vm2582, %v2574, %v2579
        %v2584 = vrsqrt.pop %v2478
        %v2585 = vmul.f32 %v2584, %v2478
        %v2586 = vmul.f32 %v2585, %v2584
        %v2587 = vmul.f32 0.5, %v2586
        %v2588 = vsub.f32 1.5, %v2587
        %v2589 = vmul.f32 %v2584, %v2588
        %vm2590 = vweird.f32 %v2478
        %vm2591 = vweird.f32 %v2584
        %vm2592 = vmor %vm2590, %vm2591
        %v2593 = vsel %vm2592, %v2584, %v2589
        %v2594 = vrsqrt.pop %v2479
        %v2595 = vmul.f32 %v2594, %v2479
        %v2596 = vmul.f32 %v2595, %v2594
        %v2597 = vmul.f32 0.5, %v2596
        %v2598 = vsub.f32 1.5, %v2597
        %v2599 = vmul.f32 %v2594, %v2598
        %vm2600 = vweird.f32 %v2479
        %vm2601 = vweird.f32 %v2594
        %vm2602 = vmor %vm2600, %vm2601
        %v2603 = vsel %vm2602, %v2594, %v2599
        %v2604 = vrsqrt.pop %v2480
        %v2605 = vmul.f32 %v2604, %v2480
        %v2606 = vmul.f32 %v2605, %v2604
        %v2607 = vmul.f32 0.5, %v2606
        %v2608 = vsub.f32 1.5, %v2607
        %v2609 = vmul.f32 %v2604, %v2608
        %vm2610 = vweird.f32 %v2480
        %vm2611 = vweird.f32 %v2604
        %vm2612 = vmor %vm2610, %vm2611
        %v2613 = vsel %vm2612, %v2604, %v2609
        %v2614 = vrsqrt.pop %v2481
        %v2615 = vmul.f32 %v2614, %v2481
        %v2616 = vmul.f32 %v2615, %v2614
        %v2617 = vmul.f32 0.5, %v2616
        %v2618 = vsub.f32 1.5, %v2617
        %v2619 = vmul.f32 %v2614, %v2618
        %vm2620 = vweird.f32 %v2481
        %vm2621 = vweird.f32 %v2614
        %vm2622 = vmor %vm2620, %vm2621
        %v2623 = vsel %vm2622, %v2614, %v2619
        %v2624 = vrsqrt.pop %v2482
        %v2625 = vmul.f32 %v2624, %v2482
        %v2626 = vmul.f32 %v2625, %v2624
        %v2627 = vmul.f32 0.5, %v2626
        %v2628 = vsub.f32 1.5, %v2627
        %v2629 = vmul.f32 %v2624, %v2628
        %vm2630 = vweird.f32 %v2482
        %vm2631 = vweird.f32 %v2624
        %vm2632 = vmor %vm2630, %vm2631
        %v2633 = vsel %vm2632, %v2624, %v2629
        %v2634 = vrsqrt.pop %v2483
        %v2635 = vmul.f32 %v2634, %v2483
        %v2636 = vmul.f32 %v2635, %v2634
        %v2637 = vmul.f32 0.5, %v2636
        %v2638 = vsub.f32 1.5, %v2637
        %v2639 = vmul.f32 %v2634, %v2638
        %vm2640 = vweird.f32 %v2483
        %vm2641 = vweird.f32 %v2634
        %vm2642 = vmor %vm2640, %vm2641
        %v2643 = vsel %vm2642, %v2634, %v2639
        %v2644 = vmul.f32 %v2452, %v2493
        %v2645 = vmul.f32 %v2453, %v2503
        %v2646 = vmul.f32 %v2454, %v2513
        %v2647 = vmul.f32 %v2455, %v2523
        %v2648 = vmul.f32 %v2456, %v2533
        %v2649 = vmul.f32 %v2457, %v2543
        %v2650 = vmul.f32 %v2458, %v2553
        %v2651 = vmul.f32 %v2459, %v2563
        %v2652 = vmul.f32 %v2460, %v2573
        %v2653 = vmul.f32 %v2461, %v2583
        %v2654 = vmul.f32 %v2462, %v2593
        %v2655 = vmul.f32 %v2463, %v2603
        %v2656 = vmul.f32 %v2464, %v2613
        %v2657 = vmul.f32 %v2465, %v2623
        %v2658 = vmul.f32 %v2466, %v2633
        %v2659 = vmul.f32 %v2467, %v2643
        %v2660 = vperm.slane %v1561, 1
        %v2661 = vmul.f32 %v2644, %v2660
        %v2662 = vmul.f32 %v2645, %v2660
        %v2663 = vmul.f32 %v2646, %v2660
        %v2664 = vmul.f32 %v2647, %v2660
        %v2665 = vmul.f32 %v2648, %v2660
        %v2666 = vmul.f32 %v2649, %v2660
        %v2667 = vmul.f32 %v2650, %v2660
        %v2668 = vmul.f32 %v2651, %v2660
        %v2669 = vmul.f32 %v2652, %v2660
        %v2670 = vmul.f32 %v2653, %v2660
        %v2671 = vmul.f32 %v2654, %v2660
        %v2672 = vmul.f32 %v2655, %v2660
        %v2673 = vmul.f32 %v2656, %v2660
        %v2674 = vmul.f32 %v2657, %v2660
        %v2675 = vmul.f32 %v2658, %v2660
        %v2676 = vmul.f32 %v2659, %v2660
        %v2677 = vperm.slane %v1561, 2
        %v2678 = vadd.f32 %v2661, %v2677
        %v2679 = vadd.f32 %v2662, %v2677
        %v2680 = vadd.f32 %v2663, %v2677
        %v2681 = vadd.f32 %v2664, %v2677
        %v2682 = vadd.f32 %v2665, %v2677
        %v2683 = vadd.f32 %v2666, %v2677
        %v2684 = vadd.f32 %v2667, %v2677
        %v2685 = vadd.f32 %v2668, %v2677
        %v2686 = vadd.f32 %v2669, %v2677
        %v2687 = vadd.f32 %v2670, %v2677
        %v2688 = vadd.f32 %v2671, %v2677
        %v2689 = vadd.f32 %v2672, %v2677
        %v2690 = vadd.f32 %v2673, %v2677
        %v2691 = vadd.f32 %v2674, %v2677
        %v2692 = vadd.f32 %v2675, %v2677
        %v2693 = vadd.f32 %v2676, %v2677
        %v2694 = vld [vmem:[#allocation11] sm:$0xf]
        %v2695 = vld [vmem:[#allocation11 + $0x4] sm:$0xf]
        %v2696 = vld [vmem:[#allocation11 + $0x8] sm:$0xf]
        %v2697 = vld [vmem:[#allocation11 + $0xc] sm:$0xf]
        %v2698 = vld [vmem:[#allocation11 + $0x10] sm:$0xf]
        %v2699 = vld [vmem:[#allocation11 + $0x14] sm:$0xf]
        %v2700 = vld [vmem:[#allocation11 + $0x18] sm:$0xf]
        %v2701 = vld [vmem:[#allocation11 + $0x1c] sm:$0xf]
        %v2702 = vld [vmem:[#allocation11 + $0x20] sm:$0xf]
        %v2703 = vld [vmem:[#allocation11 + $0x24] sm:$0xf]
        %v2704 = vld [vmem:[#allocation11 + $0x28] sm:$0xf]
        %v2705 = vld [vmem:[#allocation11 + $0x2c] sm:$0xf]
        %v2706 = vld [vmem:[#allocation11 + $0x30] sm:$0xf]
        %v2707 = vld [vmem:[#allocation11 + $0x34] sm:$0xf]
        %v2708 = vld [vmem:[#allocation11 + $0x38] sm:$0xf]
        %v2709 = vld [vmem:[#allocation11 + $0x3c] sm:$0xf]
        %v2710 = vld [vmem:[%s6] sm:$0x1]
        %v2711 = vpack.c.bf16 %v2679, %v2678
        %v2712 = vpack.c.bf16 %v2681, %v2680
        %v2713 = vpack.c.bf16 %v2683, %v2682
        %v2714 = vpack.c.bf16 %v2685, %v2684
        %v2715 = vpack.c.bf16 %v2687, %v2686
        %v2716 = vpack.c.bf16 %v2689, %v2688
        %v2717 = vpack.c.bf16 %v2691, %v2690
        %v2718 = vpack.c.bf16 %v2693, %v2692
        %v2720 = vperm.slane %v2710, 0
        %v2738 = vunpack.c.l.b16 %v2694
        %v2739 = vunpack.c.l.b16 %v2695
        %v2740 = vunpack.c.l.b16 %v2696
        %v2741 = vunpack.c.l.b16 %v2697
        %v2742 = vunpack.c.l.b16 %v2698
        %v2743 = vunpack.c.l.b16 %v2699
        %v2744 = vunpack.c.l.b16 %v2700
        %v2745 = vunpack.c.l.b16 %v2701
        %v2746 = vunpack.c.l.b16 %v2702
        %v2747 = vunpack.c.l.b16 %v2703
        %v2748 = vunpack.c.l.b16 %v2704
        %v2749 = vunpack.c.l.b16 %v2705
        %v2750 = vunpack.c.l.b16 %v2706
        %v2751 = vunpack.c.l.b16 %v2707
        %v2752 = vunpack.c.l.b16 %v2708
        %v2753 = vunpack.c.l.b16 %v2709
        %v2754 = vpack.c.b16 %v2739, %v2738
        %v2755 = vpack.c.b16 %v2741, %v2740
        %v2756 = vpack.c.b16 %v2743, %v2742
        %v2757 = vpack.c.b16 %v2745, %v2744
        %v2758 = vpack.c.b16 %v2747, %v2746
        %v2759 = vpack.c.b16 %v2749, %v2748
        %v2760 = vpack.c.b16 %v2751, %v2750
        %v2761 = vpack.c.b16 %v2753, %v2752
        %2770 = vmatpush.bf16.msra.mxu0 %v2761
        %2771 = vmatpush.bf16.msra.mxu0 %v2760
        %2772 = vmatpush.bf16.msra.mxu0 %v2759
        %2773 = vmatpush.bf16.msra.mxu0 %v2758
        %2774 = vmatpush.bf16.msra.mxu0 %v2757
        %2775 = vmatpush.bf16.msra.mxu0 %v2756
        %2776 = vmatpush.bf16.msra.mxu0 %v2755
        %2777 = vmatpush.bf16.msra.mxu0 %v2754
        %2778 = vmatmul.bf16.gmra.mxu0 %v2711
        %v2779 = vpop.f32.mrf.mxu0
        %v2780 = vadd.f32 %v2720, %v2779
        %v2781 = vpop.f32.mrf.mxu0
        %v2782 = vadd.f32 %v2720, %v2781
        %2783 = vmatmul.bf16.gmra.mxu0 %v2712
        %v2784 = vpop.f32.mrf.mxu0
        %v2785 = vadd.f32 %v2720, %v2784
        %v2786 = vpop.f32.mrf.mxu0
        %v2787 = vadd.f32 %v2720, %v2786
        %2788 = vmatmul.bf16.gmra.mxu0 %v2713
        %v2789 = vpop.f32.mrf.mxu0
        %v2790 = vadd.f32 %v2720, %v2789
        %v2791 = vpop.f32.mrf.mxu0
        %v2792 = vadd.f32 %v2720, %v2791
        %2793 = vmatmul.bf16.gmra.mxu0 %v2714
        %v2794 = vpop.f32.mrf.mxu0
        %v2795 = vadd.f32 %v2720, %v2794
        %v2796 = vpop.f32.mrf.mxu0
        %v2797 = vadd.f32 %v2720, %v2796
        %2798 = vmatmul.bf16.gmra.mxu0 %v2715
        %v2799 = vpop.f32.mrf.mxu0
        %v2800 = vadd.f32 %v2720, %v2799
        %v2801 = vpop.f32.mrf.mxu0
        %v2802 = vadd.f32 %v2720, %v2801
        %2803 = vmatmul.bf16.gmra.mxu0 %v2716
        %v2804 = vpop.f32.mrf.mxu0
        %v2805 = vadd.f32 %v2720, %v2804
        %v2806 = vpop.f32.mrf.mxu0
        %v2807 = vadd.f32 %v2720, %v2806
        %2808 = vmatmul.bf16.gmra.mxu0 %v2717
        %v2809 = vpop.f32.mrf.mxu0
        %v2810 = vadd.f32 %v2720, %v2809
        %v2811 = vpop.f32.mrf.mxu0
        %v2812 = vadd.f32 %v2720, %v2811
        %2813 = vmatmul.bf16.gmra.mxu0 %v2718
        %v2814 = vpop.f32.mrf.mxu0
        %v2815 = vadd.f32 %v2720, %v2814
        %v2816 = vpop.f32.mrf.mxu0
        %v2817 = vadd.f32 %v2720, %v2816
        %2818 = vdwg.mxu0
        %2819 = vst [vmem:[%s377] sm:$0xff] %v2780
        %2820 = vst [vmem:[%s377 + $0x8] sm:$0xff] %v2782
        %2821 = vst [vmem:[%s377 + $0x10] sm:$0xff] %v2785
        %2822 = vst [vmem:[%s377 + $0x18] sm:$0xff] %v2787
        %2823 = vst [vmem:[%s377 + $0x20] sm:$0xff] %v2790
        %2824 = vst [vmem:[%s377 + $0x28] sm:$0xff] %v2792
        %2825 = vst [vmem:[%s377 + $0x30] sm:$0xff] %v2795
        %2826 = vst [vmem:[%s377 + $0x38] sm:$0xff] %v2797
        %2827 = vst [vmem:[%s377 + $0x40] sm:$0xff] %v2800
        %2828 = vst [vmem:[%s377 + $0x48] sm:$0xff] %v2802
        %2829 = vst [vmem:[%s377 + $0x50] sm:$0xff] %v2805
        %2830 = vst [vmem:[%s377 + $0x58] sm:$0xff] %v2807
        %2831 = vst [vmem:[%s377 + $0x60] sm:$0xff] %v2810
        %2832 = vst [vmem:[%s377 + $0x68] sm:$0xff] %v2812
        %2833 = vst [vmem:[%s377 + $0x70] sm:$0xff] %v2815
        %2834 = vst [vmem:[%s377 + $0x78] sm:$0xff] %v2817
        %s2835 = sand.u32 %s187, 1
        %s2836 = scalar_lea.sflag [#allocation4], %s2835
        %s2837 = sand.u32 %s187, 1
        %s2838 = smul.addr %s2837, 128
        %s2839 = scalar_lea.vmem [#allocation13], %s2838
        // Predicated region
        $region73: #{tpu_custom_call.1} parent=47 // pred_check
          %p2840 = pneg %p197
        $region74: #{tpu_custom_call.1} parent=47 // pred_check_branch
          %2842 = sbr.rel (%p2840) target = $region76
        $region75: #{tpu_custom_call.1} parent=47 // pred_region
          %s2843 = smul.u32 16, %s27
          %2845 = vsyncadd %s2836, 0
          %s2846 = smul.addr %s2843, 8
          %s2847 = scalar_lea.hbm %s7, %s2846
          %s2848 = sshll.u32 %s2839, 4
          %s2849 = int_to_ptr.vmem [resolvable:$true] %s2848
          %s2850 = sshll.u32 %s2847, 4
          %s2851 = int_to_ptr.hbm [resolvable:$true] %s2850
          %2856 = dma.vmem_to_hbm [thread:$0]  %s2849, 2048, %s2851, %s2836, 128, 128, 8
        $region76: #{tpu_custom_call.1} parent=47 // pred_fallthru
          _
      $region48: #{tpu_custom_call.1} parent=5 // pred_fallthru
        _
      %p2857 = scmp.le.s32.totalorder 2, %s22
      // Predicated region
      $region77: #{tpu_custom_call.1} parent=5 // pred_check
        %p2858 = pneg %p2857
      $region78: #{tpu_custom_call.1} parent=5 // pred_check_branch
        %2860 = sbr.rel (%p2858) target = $region80
      $region79: #{tpu_custom_call.1} parent=5 // pred_region
        %s2861 = ssub.s32 %s22, 2
        // Predicated region
        $region81: #{tpu_custom_call.1} parent=79 // pred_check
          %p2862 = pneg %p203
        $region82: #{tpu_custom_call.1} parent=79 // pred_check_branch
          %2864 = sbr.rel (%p2862) target = $region84
        $region83: #{tpu_custom_call.1} parent=79 // pred_region
          %s2865 = sand.u32 %s188, 1
          %s2866 = scalar_lea.sflag [#allocation4], %s2865
          %s2867 = sand.u32 %s188, 1
          %s2868 = smul.addr %s2867, 128
          %s2869 = scalar_lea.vmem [#allocation13], %s2868
          %2871 = dma.done %s2866, 2048
        $region84: #{tpu_custom_call.1} parent=79 // pred_fallthru
          _
      $region80: #{tpu_custom_call.1} parent=5 // pred_fallthru
        _
    $region6: #{tpu_custom_call.1} parent=1 // loop_footer
      %s26 = sadd.s32 1, %s22
    $region7: #{tpu_custom_call.1} parent=1 // loop_footer_branch
      %21 = sbr.rel target = $region3
    $region8: #{tpu_custom_call.1} parent=1 // loop_exit
      _
    %2872 = vsyncpa [#allocation3], 1
    %s2873 = scalar_lea.sflag [#allocation3], 1
    %2874 = vsyncpa %s2873, 1
    %2875 = vsyncpa [#allocation6], 1
    %2876 = vsyncpa [#allocation9], 1
    %2877 = vsyncpa [#allocation12], 1
    %2878 = vsyncpa [#allocation4], 1
    %s2879 = scalar_lea.sflag [#allocation4], 1
    %2880 = vsyncpa %s2879, 1

</llo_original>
